<compile_context>
chip_gen: v7x
topology: tpu7x:2x2x1
jax: 0.10.0
libtpu: 0.0.40
codegen_flags: <defaults>
</compile_context>

<pallas_src>
import functools

import jax
import jax.numpy as jnp
from jax.experimental import pallas as pl
from jax.experimental.pallas import tpu as pltpu


def _round_up(x, m):
    return (x + m - 1) // m * m


def _embeddings_kernel(wid_smem, nvalid_smem,            # scalar-prefetch: flat word ids, valid count
                       pid_ref, tid_ref,                 # (row_tile, 1) int32 position / type ids
                       ttab_ref, ptab_ref,               # VMEM-resident type & position tables
                       gamma_ref, beta_ref,              # (1, H) f32 LayerNorm params
                       wtab_hbm,                         # word table, stays in HBM (pl.ANY)
                       out_ref,                          # (row_tile, H) output tile
                       wrows, sems,                      # scratch: gathered word rows + per-chunk sems
                       *, eps: float, row_tile: int, chunk: int):
    n_chunks = row_tile // chunk
    max_pos = ptab_ref.shape[0]
    n_types = ttab_ref.shape[0]

    base = pl.program_id(0) * row_tile
    nvalid = nvalid_smem[0]                 # read SMEM scalars before any DMA wait

    # Phase 1: issue every word-row gather for this tile up front (skip padded tail rows).
    # One semaphore per chunk so phase 2 can drain chunk-by-chunk.
    for c in range(n_chunks):               # static -> sems index is a compile-time constant
        def issue(r, carry, c=c):
            row = c * chunk + r

            @pl.when(base + row < nvalid)
            def _():
                w = wid_smem[base + row]
                pltpu.make_async_copy(wtab_hbm.at[pl.ds(w, 1), :],
                                      wrows.at[pl.ds(row, 1), :],
                                      sems.at[c]).start()
            return carry
        jax.lax.fori_loop(0, chunk, issue, 0, unroll=8)

    gamma = gamma_ref[...]                                   # (1, H) f32
    beta = beta_ref[...]
    t_rows = [ttab_ref[t, :].astype(jnp.float32) for t in range(n_types)]   # tiny table

    # Phase 2: per chunk -> pos/type embeddings (independent of the gather), then wait this
    # chunk's word-row DMAs, add, LayerNorm, store.  Early-chunk compute hides the HBM
    # latency of later-chunk gathers.
    @pl.loop(0, n_chunks)
    def _(c):
        off = pl.multiple_of(c * chunk, chunk)
        pid_c = pid_ref[pl.ds(off, chunk), :]                # (chunk, 1) int32
        tid_c = tid_ref[pl.ds(off, chunk), :]

        # Position embedding: one-hot matmul against the VMEM-resident table (idle MXU;
        # exact because every one-hot row has a single 1).
        pos_iota = jax.lax.broadcasted_iota(jnp.int32, (chunk, max_pos), 1)
        onehot = (pid_c == pos_iota).astype(ptab_ref.dtype)
        emb = jnp.dot(onehot, ptab_ref[...], preferred_element_type=jnp.float32)

        # Token-type embedding: tiny table -> VPU select (single where for the common T=2).
        if n_types == 2:
            emb = emb + jnp.where(tid_c == 0, t_rows[0], t_rows[1])
        else:
            for t in range(n_types):
                emb = emb + jnp.where(tid_c == t, t_rows[t], 0.0)

        # Drain exactly the word-row DMAs issued for this chunk (all copies on a given
        # semaphore have identical (1, H) size, so per-row waits account correctly).
        valid_c = jnp.clip(nvalid - (base + off), 0, chunk)

        def drain(r, carry):
            @pl.when(r < valid_c)
            def _():
                pltpu.make_async_copy(wtab_hbm.at[pl.ds(0, 1), :],
                                      wrows.at[pl.ds(off, 1), :],
                                      sems.at[c]).wait()
            return carry
        jax.lax.fori_loop(0, chunk, drain, 0, unroll=8)

        emb = emb + wrows[pl.ds(off, chunk), :].astype(jnp.float32)

        # LayerNorm over hidden in a single pass (E[x^2] - mean^2), biased variance with
        # eps inside rsqrt — matches nn.LayerNorm(eps=1e-12).
        mean = jnp.mean(emb, axis=-1, keepdims=True)
        var = jnp.maximum(jnp.mean(emb * emb, axis=-1, keepdims=True) - mean * mean, 0.0)
        norm = (emb - mean) * jax.lax.rsqrt(var + eps)
        out_ref[pl.ds(off, chunk), :] = (norm * gamma + beta).astype(out_ref.dtype)
    # TODO(synk): dropout is identity here (eval mode); training-mode dropout would use
    # pltpu.prng_seed + pltpu.prng_random_bits to build a keep-mask in-kernel.


def embeddings_forward(input_ids, word_table, pos_table, type_table,
                       ln_gamma, ln_beta,
                       token_type_ids=None, position_ids=None,
                       *, eps=1e-12, row_tile=256):
    """Pallas equivalent of Embeddings.forward (dropout in eval mode).

    Word table stays in HBM and is row-gathered by DMA (chunk-pipelined within each tile);
    the position/type tables and LayerNorm params are VMEM-resident.
    """
    b, s = input_ids.shape
    h = word_table.shape[1]
    n = b * s

    if position_ids is None:
        position_ids = jnp.broadcast_to(jnp.arange(s, dtype=jnp.int32)[None, :], (b, s))
    if token_type_ids is None:
        token_type_ids = jnp.zeros_like(input_ids)

    # Large row tile amortizes per-step overhead; multiple of 8 for the (8,128) tiling rule.
    # Prefer >= 2 grid steps so dimension_semantics=("parallel",) can shard across v7x's 2 TCs.
    row_tile = _round_up(max(8, min(row_tile, _round_up(n, 8))), 8)
    if n > 8 and _round_up(n, row_tile) // row_tile < 2:
        row_tile = min(row_tile, _round_up((n + 1) // 2, 8))
    chunk = 32 if row_tile % 32 == 0 else 8
    n_pad = _round_up(n, row_tile)
    pad = n_pad - n

    wid = jnp.pad(input_ids.astype(jnp.int32).reshape(n), (0, pad))
    pid = jnp.pad(position_ids.astype(jnp.int32).reshape(n), (0, pad)).reshape(n_pad, 1)
    tid = jnp.pad(token_type_ids.astype(jnp.int32).reshape(n), (0, pad)).reshape(n_pad, 1)
    nvalid = jnp.array([n], dtype=jnp.int32)

    dtype = word_table.dtype                       # keep table dtype (bf16-friendly)
    pos_table = pos_table.astype(dtype)
    type_table = type_table.astype(dtype)
    gamma2d = ln_gamma.reshape(1, h).astype(jnp.float32)
    beta2d = ln_beta.reshape(1, h).astype(jnp.float32)

    grid = (n_pad // row_tile,)
    kernel = functools.partial(_embeddings_kernel, eps=eps, row_tile=row_tile, chunk=chunk)

    itemsize = jnp.dtype(dtype).itemsize
    cost = pl.CostEstimate(
        flops=int(n_pad * h * (2 * pos_table.shape[0] + 12)),
        transcendentals=int(n_pad),
        bytes_accessed=int(n_pad * h * 2 * itemsize
                           + pos_table.size * itemsize + type_table.size * itemsize
                           + 3 * n_pad * 4),
    )

    # TODO(synk): on v5e/v6e (128 MiB VMEM) with very large token counts, a VMEM-resident
    # word table (constant-index BlockSpec + raised vmem_limit_bytes) can beat the HBM
    # row gather; kept the gather path since it is the right choice on v7x (64 MiB/TC).
    out = pl.pallas_call(
        kernel,
        out_shape=jax.ShapeDtypeStruct((n_pad, h), dtype),
        grid_spec=pltpu.PrefetchScalarGridSpec(
            num_scalar_prefetch=2,                 # wid + valid-count -> SMEM, drive DMA gather
            grid=grid,
            in_specs=[
                pl.BlockSpec((row_tile, 1), lambda i, wid, nv: (i, 0)),       # position ids
                pl.BlockSpec((row_tile, 1), lambda i, wid, nv: (i, 0)),       # type ids
                pl.BlockSpec(type_table.shape, lambda i, wid, nv: (0, 0)),    # type table (tiny)
                pl.BlockSpec(pos_table.shape, lambda i, wid, nv: (0, 0)),     # pos table (VMEM)
                pl.BlockSpec((1, h), lambda i, wid, nv: (0, 0)),              # gamma
                pl.BlockSpec((1, h), lambda i, wid, nv: (0, 0)),              # beta
                pl.BlockSpec(memory_space=pl.ANY),                            # word table (HBM)
            ],
            out_specs=pl.BlockSpec((row_tile, h), lambda i, wid, nv: (i, 0)),
            scratch_shapes=[
                pltpu.VMEM((row_tile, h), dtype),              # gathered word rows
                pltpu.SemaphoreType.DMA((row_tile // chunk,)),  # one sem per chunk
            ]),
        compiler_params=pltpu.CompilerParams(
            dimension_semantics=("parallel",)),
        cost_estimate=cost,
    )(wid, nvalid, pid, tid, type_table, pos_table, gamma2d, beta2d, word_table)

    return out[:n].reshape(b, s, h)


def _reference(input_ids, word_table, pos_table, type_table, ln_gamma, ln_beta,
               token_type_ids=None, position_ids=None, eps=1e-12):
    b, s = input_ids.shape
    if position_ids is None:
        position_ids = jnp.broadcast_to(jnp.arange(s, dtype=jnp.int32)[None, :], (b, s))
    if token_type_ids is None:
        token_type_ids = jnp.zeros_like(input_ids)
    ref = word_table[input_ids] + pos_table[position_ids] + type_table[token_type_ids]
    mean = ref.mean(-1, keepdims=True)
    var = ((ref - mean) ** 2).mean(-1, keepdims=True)
    return (ref - mean) / jnp.sqrt(var + eps) * ln_gamma + ln_beta


if __name__ == "__main__":
    # Small, deterministic configuration.
    vocab_size = 128
    hidden_size = 32
    max_position_embeddings = 64
    type_vocab_size = 2
    batch, seq = 2, 8

    key = jax.random.PRNGKey(0)
    k_w, k_p, k_t, k_ids, k_seg = jax.random.split(key, 5)

    # nn.Embedding default init: N(0, 1); nn.LayerNorm default: weight=1, bias=0.
    word_table = jax.random.normal(k_w, (vocab_size, hidden_size), jnp.float32)
    pos_table = jax.random.normal(k_p, (max_position_embeddings, hidden_size), jnp.float32)
    type_table = jax.random.normal(k_t, (type_vocab_size, hidden_size), jnp.float32)
    ln_gamma = jnp.ones((hidden_size,), jnp.float32)
    ln_beta = jnp.zeros((hidden_size,), jnp.float32)

    input_ids = jax.random.randint(k_ids, (batch, seq), 0, vocab_size, jnp.int32)
    token_type_ids = jax.random.randint(k_seg, (batch, seq), 0, type_vocab_size, jnp.int32)

    # 1) Small row_tile -> multi-step grid, no padding.
    out = embeddings_forward(input_ids, word_table, pos_table, type_table,
                             ln_gamma, ln_beta, token_type_ids=token_type_ids,
                             row_tile=8)
    out = jax.block_until_ready(out)
    ref = _reference(input_ids, word_table, pos_table, type_table, ln_gamma, ln_beta,
                     token_type_ids=token_type_ids)
    assert out.shape == (batch, seq, hidden_size)
    assert jnp.allclose(out, ref, atol=1e-5), float(jnp.max(jnp.abs(out - ref)))

    # 2) Default row_tile with a ragged token count -> exercises padded-tail DMA skip
    #    and default position/token-type ids.
    ids2 = jax.random.randint(jax.random.PRNGKey(1), (3, 5), 0, vocab_size, jnp.int32)
    out2 = embeddings_forward(ids2, word_table, pos_table, type_table, ln_gamma, ln_beta)
    out2 = jax.block_until_ready(out2)
    ref2 = _reference(ids2, word_table, pos_table, type_table, ln_gamma, ln_beta)
    assert out2.shape == (3, 5, hidden_size)
    assert jnp.allclose(out2, ref2, atol=1e-5), float(jnp.max(jnp.abs(out2 - ref2)))

    print("KERNEL_OK")
</pallas_src>

<mosaic_0001>
module attributes {stable_mosaic.version = 11 : i64} {
  func.func @_embeddings_kernel(%arg0: i32, %arg1: memref<16xi32, #tpu.memory_space<smem>>, %arg2: memref<1xi32, #tpu.memory_space<smem>>, %arg3: memref<8x1xi32, #tpu.memory_space<vmem>>, %arg4: memref<8x1xi32, #tpu.memory_space<vmem>>, %arg5: memref<2x32xf32, #tpu.memory_space<vmem>>, %arg6: memref<64x32xf32, #tpu.memory_space<vmem>>, %arg7: memref<1x32xf32, #tpu.memory_space<vmem>>, %arg8: memref<1x32xf32, #tpu.memory_space<vmem>>, %arg9: memref<128x32xf32, #tpu.memory_space<any>>, %arg10: memref<8x32xf32, #tpu.memory_space<vmem>>, %arg11: memref<8x32xf32, #tpu.memory_space<vmem>>, %arg12: memref<1x!tpu.dma_semaphore, #tpu.memory_space<semaphore_mem>>) attributes {dimension_semantics = [#tpu.dimension_semantics<parallel>], iteration_bounds = array<i64: 2>, scalar_prefetch = 2 : i64, scratch_operands = 2 : i64, tpu.core_type = #tpu.core_type<tc>, window_params = [{transform_indices = @transform_0, window_bounds = array<i64: 8, 1>}, {transform_indices = @transform_1, window_bounds = array<i64: 8, 1>}, {pipeline_mode = #tpu.pipeline_mode<synchronous>, transform_indices = @transform_2, window_bounds = array<i64: 2, 32>}, {pipeline_mode = #tpu.pipeline_mode<synchronous>, transform_indices = @transform_3, window_bounds = array<i64: 64, 32>}, {pipeline_mode = #tpu.pipeline_mode<synchronous>, transform_indices = @transform_4, window_bounds = array<i64: 1, 32>}, {pipeline_mode = #tpu.pipeline_mode<synchronous>, transform_indices = @transform_5, window_bounds = array<i64: 1, 32>}, {}, {transform_indices = @transform_7, window_bounds = array<i64: 8, 32>}]} {
    %c8_i32 = arith.constant 8 : i32
    %0 = arith.muli %arg0, %c8_i32 : i32
    %c0 = arith.constant 0 : index
    %1 = memref.load %arg2[%c0] : memref<1xi32, #tpu.memory_space<smem>>
    %c0_i32 = arith.constant 0 : i32
    %c0_i32_0 = arith.constant 0 : i32
    %2 = arith.addi %c0_i32_0, %c0_i32 : i32
    %3 = arith.addi %0, %2 : i32
    %4 = arith.cmpi slt, %3, %1 : i32
    %5 = arith.extui %4 : i1 to i32
    %c0_i32_1 = arith.constant 0 : i32
    %6 = arith.cmpi ne, %5, %c0_i32_1 : i32
    scf.if %6 {
      %130 = arith.addi %0, %2 : i32
      %131 = arith.index_cast %130 : i32 to index
      %132 = memref.load %arg1[%131] : memref<16xi32, #tpu.memory_space<smem>>
      %c0_i32_61 = arith.constant 0 : i32
      %c0_i32_62 = arith.constant 0 : i32
      %133 = tpu.memref_slice %arg9[%132, %c0_i32_62] : memref<128x32xf32, #tpu.memory_space<any>> -> memref<1x32xf32, #tpu.memory_space<any>>
      %c0_i32_63 = arith.constant 0 : i32
      %134 = tpu.memref_slice %arg11[%2, %c0_i32_63] : memref<8x32xf32, #tpu.memory_space<vmem>> -> memref<1x32xf32, #tpu.memory_space<vmem>>
      %135 = tpu.memref_slice %arg12[%c0_i32_61] : memref<1x!tpu.dma_semaphore, #tpu.memory_space<semaphore_mem>> -> memref<1x!tpu.dma_semaphore, #tpu.memory_space<semaphore_mem>>
      %136 = tpu.memref_squeeze %135 : memref<1x!tpu.dma_semaphore, #tpu.memory_space<semaphore_mem>> -> memref<!tpu.dma_semaphore, #tpu.memory_space<semaphore_mem>>
      tpu.enqueue_dma source(%133 : memref<1x32xf32, #tpu.memory_space<any>>) target(%134 : memref<1x32xf32, #tpu.memory_space<vmem>>) target_semaphore(%136 : memref<!tpu.dma_semaphore, #tpu.memory_space<semaphore_mem>>)
    } else {
    }
    %c1_i32 = arith.constant 1 : i32
    %c0_i32_2 = arith.constant 0 : i32
    %7 = arith.addi %c0_i32_2, %c1_i32 : i32
    %8 = arith.addi %0, %7 : i32
    %9 = arith.cmpi slt, %8, %1 : i32
    %10 = arith.extui %9 : i1 to i32
    %c0_i32_3 = arith.constant 0 : i32
    %11 = arith.cmpi ne, %10, %c0_i32_3 : i32
    scf.if %11 {
      %130 = arith.addi %0, %7 : i32
      %131 = arith.index_cast %130 : i32 to index
      %132 = memref.load %arg1[%131] : memref<16xi32, #tpu.memory_space<smem>>
      %c0_i32_61 = arith.constant 0 : i32
      %c0_i32_62 = arith.constant 0 : i32
      %133 = tpu.memref_slice %arg9[%132, %c0_i32_62] : memref<128x32xf32, #tpu.memory_space<any>> -> memref<1x32xf32, #tpu.memory_space<any>>
      %c0_i32_63 = arith.constant 0 : i32
      %134 = tpu.memref_slice %arg11[%7, %c0_i32_63] : memref<8x32xf32, #tpu.memory_space<vmem>> -> memref<1x32xf32, #tpu.memory_space<vmem>>
      %135 = tpu.memref_slice %arg12[%c0_i32_61] : memref<1x!tpu.dma_semaphore, #tpu.memory_space<semaphore_mem>> -> memref<1x!tpu.dma_semaphore, #tpu.memory_space<semaphore_mem>>
      %136 = tpu.memref_squeeze %135 : memref<1x!tpu.dma_semaphore, #tpu.memory_space<semaphore_mem>> -> memref<!tpu.dma_semaphore, #tpu.memory_space<semaphore_mem>>
      tpu.enqueue_dma source(%133 : memref<1x32xf32, #tpu.memory_space<any>>) target(%134 : memref<1x32xf32, #tpu.memory_space<vmem>>) target_semaphore(%136 : memref<!tpu.dma_semaphore, #tpu.memory_space<semaphore_mem>>)
    } else {
    }
    %c2_i32 = arith.constant 2 : i32
    %c0_i32_4 = arith.constant 0 : i32
    %12 = arith.addi %c0_i32_4, %c2_i32 : i32
    %13 = arith.addi %0, %12 : i32
    %14 = arith.cmpi slt, %13, %1 : i32
    %15 = arith.extui %14 : i1 to i32
    %c0_i32_5 = arith.constant 0 : i32
    %16 = arith.cmpi ne, %15, %c0_i32_5 : i32
    scf.if %16 {
      %130 = arith.addi %0, %12 : i32
      %131 = arith.index_cast %130 : i32 to index
      %132 = memref.load %arg1[%131] : memref<16xi32, #tpu.memory_space<smem>>
      %c0_i32_61 = arith.constant 0 : i32
      %c0_i32_62 = arith.constant 0 : i32
      %133 = tpu.memref_slice %arg9[%132, %c0_i32_62] : memref<128x32xf32, #tpu.memory_space<any>> -> memref<1x32xf32, #tpu.memory_space<any>>
      %c0_i32_63 = arith.constant 0 : i32
      %134 = tpu.memref_slice %arg11[%12, %c0_i32_63] : memref<8x32xf32, #tpu.memory_space<vmem>> -> memref<1x32xf32, #tpu.memory_space<vmem>>
      %135 = tpu.memref_slice %arg12[%c0_i32_61] : memref<1x!tpu.dma_semaphore, #tpu.memory_space<semaphore_mem>> -> memref<1x!tpu.dma_semaphore, #tpu.memory_space<semaphore_mem>>
      %136 = tpu.memref_squeeze %135 : memref<1x!tpu.dma_semaphore, #tpu.memory_space<semaphore_mem>> -> memref<!tpu.dma_semaphore, #tpu.memory_space<semaphore_mem>>
      tpu.enqueue_dma source(%133 : memref<1x32xf32, #tpu.memory_space<any>>) target(%134 : memref<1x32xf32, #tpu.memory_space<vmem>>) target_semaphore(%136 : memref<!tpu.dma_semaphore, #tpu.memory_space<semaphore_mem>>)
    } else {
    }
    %c3_i32 = arith.constant 3 : i32
    %c0_i32_6 = arith.constant 0 : i32
    %17 = arith.addi %c0_i32_6, %c3_i32 : i32
    %18 = arith.addi %0, %17 : i32
    %19 = arith.cmpi slt, %18, %1 : i32
    %20 = arith.extui %19 : i1 to i32
    %c0_i32_7 = arith.constant 0 : i32
    %21 = arith.cmpi ne, %20, %c0_i32_7 : i32
    scf.if %21 {
      %130 = arith.addi %0, %17 : i32
      %131 = arith.index_cast %130 : i32 to index
      %132 = memref.load %arg1[%131] : memref<16xi32, #tpu.memory_space<smem>>
      %c0_i32_61 = arith.constant 0 : i32
      %c0_i32_62 = arith.constant 0 : i32
      %133 = tpu.memref_slice %arg9[%132, %c0_i32_62] : memref<128x32xf32, #tpu.memory_space<any>> -> memref<1x32xf32, #tpu.memory_space<any>>
      %c0_i32_63 = arith.constant 0 : i32
      %134 = tpu.memref_slice %arg11[%17, %c0_i32_63] : memref<8x32xf32, #tpu.memory_space<vmem>> -> memref<1x32xf32, #tpu.memory_space<vmem>>
      %135 = tpu.memref_slice %arg12[%c0_i32_61] : memref<1x!tpu.dma_semaphore, #tpu.memory_space<semaphore_mem>> -> memref<1x!tpu.dma_semaphore, #tpu.memory_space<semaphore_mem>>
      %136 = tpu.memref_squeeze %135 : memref<1x!tpu.dma_semaphore, #tpu.memory_space<semaphore_mem>> -> memref<!tpu.dma_semaphore, #tpu.memory_space<semaphore_mem>>
      tpu.enqueue_dma source(%133 : memref<1x32xf32, #tpu.memory_space<any>>) target(%134 : memref<1x32xf32, #tpu.memory_space<vmem>>) target_semaphore(%136 : memref<!tpu.dma_semaphore, #tpu.memory_space<semaphore_mem>>)
    } else {
    }
    %c4_i32 = arith.constant 4 : i32
    %c0_i32_8 = arith.constant 0 : i32
    %22 = arith.addi %c0_i32_8, %c4_i32 : i32
    %23 = arith.addi %0, %22 : i32
    %24 = arith.cmpi slt, %23, %1 : i32
    %25 = arith.extui %24 : i1 to i32
    %c0_i32_9 = arith.constant 0 : i32
    %26 = arith.cmpi ne, %25, %c0_i32_9 : i32
    scf.if %26 {
      %130 = arith.addi %0, %22 : i32
      %131 = arith.index_cast %130 : i32 to index
      %132 = memref.load %arg1[%131] : memref<16xi32, #tpu.memory_space<smem>>
      %c0_i32_61 = arith.constant 0 : i32
      %c0_i32_62 = arith.constant 0 : i32
      %133 = tpu.memref_slice %arg9[%132, %c0_i32_62] : memref<128x32xf32, #tpu.memory_space<any>> -> memref<1x32xf32, #tpu.memory_space<any>>
      %c0_i32_63 = arith.constant 0 : i32
      %134 = tpu.memref_slice %arg11[%22, %c0_i32_63] : memref<8x32xf32, #tpu.memory_space<vmem>> -> memref<1x32xf32, #tpu.memory_space<vmem>>
      %135 = tpu.memref_slice %arg12[%c0_i32_61] : memref<1x!tpu.dma_semaphore, #tpu.memory_space<semaphore_mem>> -> memref<1x!tpu.dma_semaphore, #tpu.memory_space<semaphore_mem>>
      %136 = tpu.memref_squeeze %135 : memref<1x!tpu.dma_semaphore, #tpu.memory_space<semaphore_mem>> -> memref<!tpu.dma_semaphore, #tpu.memory_space<semaphore_mem>>
      tpu.enqueue_dma source(%133 : memref<1x32xf32, #tpu.memory_space<any>>) target(%134 : memref<1x32xf32, #tpu.memory_space<vmem>>) target_semaphore(%136 : memref<!tpu.dma_semaphore, #tpu.memory_space<semaphore_mem>>)
    } else {
    }
    %c5_i32 = arith.constant 5 : i32
    %c0_i32_10 = arith.constant 0 : i32
    %27 = arith.addi %c0_i32_10, %c5_i32 : i32
    %28 = arith.addi %0, %27 : i32
    %29 = arith.cmpi slt, %28, %1 : i32
    %30 = arith.extui %29 : i1 to i32
    %c0_i32_11 = arith.constant 0 : i32
    %31 = arith.cmpi ne, %30, %c0_i32_11 : i32
    scf.if %31 {
      %130 = arith.addi %0, %27 : i32
      %131 = arith.index_cast %130 : i32 to index
      %132 = memref.load %arg1[%131] : memref<16xi32, #tpu.memory_space<smem>>
      %c0_i32_61 = arith.constant 0 : i32
      %c0_i32_62 = arith.constant 0 : i32
      %133 = tpu.memref_slice %arg9[%132, %c0_i32_62] : memref<128x32xf32, #tpu.memory_space<any>> -> memref<1x32xf32, #tpu.memory_space<any>>
      %c0_i32_63 = arith.constant 0 : i32
      %134 = tpu.memref_slice %arg11[%27, %c0_i32_63] : memref<8x32xf32, #tpu.memory_space<vmem>> -> memref<1x32xf32, #tpu.memory_space<vmem>>
      %135 = tpu.memref_slice %arg12[%c0_i32_61] : memref<1x!tpu.dma_semaphore, #tpu.memory_space<semaphore_mem>> -> memref<1x!tpu.dma_semaphore, #tpu.memory_space<semaphore_mem>>
      %136 = tpu.memref_squeeze %135 : memref<1x!tpu.dma_semaphore, #tpu.memory_space<semaphore_mem>> -> memref<!tpu.dma_semaphore, #tpu.memory_space<semaphore_mem>>
      tpu.enqueue_dma source(%133 : memref<1x32xf32, #tpu.memory_space<any>>) target(%134 : memref<1x32xf32, #tpu.memory_space<vmem>>) target_semaphore(%136 : memref<!tpu.dma_semaphore, #tpu.memory_space<semaphore_mem>>)
    } else {
    }
    %c6_i32 = arith.constant 6 : i32
    %c0_i32_12 = arith.constant 0 : i32
    %32 = arith.addi %c0_i32_12, %c6_i32 : i32
    %33 = arith.addi %0, %32 : i32
    %34 = arith.cmpi slt, %33, %1 : i32
    %35 = arith.extui %34 : i1 to i32
    %c0_i32_13 = arith.constant 0 : i32
    %36 = arith.cmpi ne, %35, %c0_i32_13 : i32
    scf.if %36 {
      %130 = arith.addi %0, %32 : i32
      %131 = arith.index_cast %130 : i32 to index
      %132 = memref.load %arg1[%131] : memref<16xi32, #tpu.memory_space<smem>>
      %c0_i32_61 = arith.constant 0 : i32
      %c0_i32_62 = arith.constant 0 : i32
      %133 = tpu.memref_slice %arg9[%132, %c0_i32_62] : memref<128x32xf32, #tpu.memory_space<any>> -> memref<1x32xf32, #tpu.memory_space<any>>
      %c0_i32_63 = arith.constant 0 : i32
      %134 = tpu.memref_slice %arg11[%32, %c0_i32_63] : memref<8x32xf32, #tpu.memory_space<vmem>> -> memref<1x32xf32, #tpu.memory_space<vmem>>
      %135 = tpu.memref_slice %arg12[%c0_i32_61] : memref<1x!tpu.dma_semaphore, #tpu.memory_space<semaphore_mem>> -> memref<1x!tpu.dma_semaphore, #tpu.memory_space<semaphore_mem>>
      %136 = tpu.memref_squeeze %135 : memref<1x!tpu.dma_semaphore, #tpu.memory_space<semaphore_mem>> -> memref<!tpu.dma_semaphore, #tpu.memory_space<semaphore_mem>>
      tpu.enqueue_dma source(%133 : memref<1x32xf32, #tpu.memory_space<any>>) target(%134 : memref<1x32xf32, #tpu.memory_space<vmem>>) target_semaphore(%136 : memref<!tpu.dma_semaphore, #tpu.memory_space<semaphore_mem>>)
    } else {
    }
    %c7_i32 = arith.constant 7 : i32
    %c0_i32_14 = arith.constant 0 : i32
    %37 = arith.addi %c0_i32_14, %c7_i32 : i32
    %38 = arith.addi %0, %37 : i32
    %39 = arith.cmpi slt, %38, %1 : i32
    %40 = arith.extui %39 : i1 to i32
    %c0_i32_15 = arith.constant 0 : i32
    %41 = arith.cmpi ne, %40, %c0_i32_15 : i32
    scf.if %41 {
      %130 = arith.addi %0, %37 : i32
      %131 = arith.index_cast %130 : i32 to index
      %132 = memref.load %arg1[%131] : memref<16xi32, #tpu.memory_space<smem>>
      %c0_i32_61 = arith.constant 0 : i32
      %c0_i32_62 = arith.constant 0 : i32
      %133 = tpu.memref_slice %arg9[%132, %c0_i32_62] : memref<128x32xf32, #tpu.memory_space<any>> -> memref<1x32xf32, #tpu.memory_space<any>>
      %c0_i32_63 = arith.constant 0 : i32
      %134 = tpu.memref_slice %arg11[%37, %c0_i32_63] : memref<8x32xf32, #tpu.memory_space<vmem>> -> memref<1x32xf32, #tpu.memory_space<vmem>>
      %135 = tpu.memref_slice %arg12[%c0_i32_61] : memref<1x!tpu.dma_semaphore, #tpu.memory_space<semaphore_mem>> -> memref<1x!tpu.dma_semaphore, #tpu.memory_space<semaphore_mem>>
      %136 = tpu.memref_squeeze %135 : memref<1x!tpu.dma_semaphore, #tpu.memory_space<semaphore_mem>> -> memref<!tpu.dma_semaphore, #tpu.memory_space<semaphore_mem>>
      tpu.enqueue_dma source(%133 : memref<1x32xf32, #tpu.memory_space<any>>) target(%134 : memref<1x32xf32, #tpu.memory_space<vmem>>) target_semaphore(%136 : memref<!tpu.dma_semaphore, #tpu.memory_space<semaphore_mem>>)
    } else {
    }
    %c8_i32_16 = arith.constant 8 : i32
    %c0_17 = arith.constant 0 : index
    %c0_18 = arith.constant 0 : index
    %42 = vector.load %arg7[%c0_17, %c0_18] : memref<1x32xf32, #tpu.memory_space<vmem>>, vector<1x32xf32>
    %c0_19 = arith.constant 0 : index
    %c0_20 = arith.constant 0 : index
    %43 = vector.load %arg8[%c0_19, %c0_20] : memref<1x32xf32, #tpu.memory_space<vmem>>, vector<1x32xf32>
    %c0_21 = arith.constant 0 : index
    %c0_22 = arith.constant 0 : index
    %44 = vector.load %arg5[%c0_21, %c0_22] : memref<2x32xf32, #tpu.memory_space<vmem>>, vector<1x32xf32>
    %45 = vector.shape_cast %44 : vector<1x32xf32> to vector<32xf32>
    %c1 = arith.constant 1 : index
    %c0_23 = arith.constant 0 : index
    %46 = vector.load %arg5[%c1, %c0_23] : memref<2x32xf32, #tpu.memory_space<vmem>>, vector<1x32xf32>
    %47 = vector.shape_cast %46 : vector<1x32xf32> to vector<32xf32>
    %c0_i32_24 = arith.constant 0 : i32
    %c1_i32_25 = arith.constant 1 : i32
    %48 = arith.muli %c0_i32_24, %c1_i32_25 : i32
    %c0_i32_26 = arith.constant 0 : i32
    %49 = arith.addi %c0_i32_26, %48 : i32
    %c8_i32_27 = arith.constant 8 : i32
    %50 = arith.muli %49, %c8_i32_27 : i32
    %51 = tpu.assume_multiple %50, 8 : i32
    %52 = arith.index_cast %51 : i32 to index
    %c0_28 = arith.constant 0 : index
    %53 = vector.load %arg3[%52, %c0_28] : memref<8x1xi32, #tpu.memory_space<vmem>>, vector<8x1xi32>
    %54 = arith.index_cast %51 : i32 to index
    %c0_29 = arith.constant 0 : index
    %55 = vector.load %arg4[%54, %c0_29] : memref<8x1xi32, #tpu.memory_space<vmem>>, vector<8x1xi32>
    %56 = tpu.iota {dimensions = array<i32: 1>} : vector<8x64xi32>
    %57 = vector.broadcast %53 : vector<8x1xi32> to vector<8x64xi32>
    %58 = arith.cmpi eq, %57, %56 : vector<8x64xi32>
    %59 = arith.extui %58 : vector<8x64xi1> to vector<8x64xi32>
    %60 = arith.sitofp %59 : vector<8x64xi32> to vector<8x64xf32>
    %c0_30 = arith.constant 0 : index
    %c0_31 = arith.constant 0 : index
    %61 = vector.load %arg6[%c0_30, %c0_31] : memref<64x32xf32, #tpu.memory_space<vmem>>, vector<64x32xf32>
    %cst = arith.constant dense<0.000000e+00> : vector<8x32xf32>
    %62 = tpu.matmul %60, %61, %cst {dimension_numbers = #tpu.dot_dimension_numbers<[1], [0], [0], [1], [0, 0, 1, 1], [], []>} : vector<8x64xf32>, vector<64x32xf32>, vector<8x32xf32> -> vector<8x32xf32>
    %c0_i32_32 = arith.constant 0 : i32
    %63 = vector.broadcast %c0_i32_32 : i32 to vector<8x1xi32>
    %64 = arith.cmpi eq, %55, %63 : vector<8x1xi32>
    %65 = vector.shape_cast %64 : vector<8x1xi1> to vector<8x1xi1>
    %66 = vector.broadcast %65 : vector<8x1xi1> to vector<8x32xi1>
    %67 = vector.shape_cast %45 : vector<32xf32> to vector<1x32xf32>
    %68 = vector.broadcast %67 : vector<1x32xf32> to vector<8x32xf32>
    %69 = vector.shape_cast %47 : vector<32xf32> to vector<1x32xf32>
    %70 = vector.broadcast %69 : vector<1x32xf32> to vector<8x32xf32>
    %71 = arith.select %66, %68, %70 : vector<8x32xi1>, vector<8x32xf32>
    %72 = arith.addf %62, %71 : vector<8x32xf32>
    %73 = arith.addi %0, %51 : i32
    %74 = arith.subi %1, %73 : i32
    %c0_i32_33 = arith.constant 0 : i32
    %c8_i32_34 = arith.constant 8 : i32
    %75 = arith.maxsi %c0_i32_33, %74 : i32
    %76 = arith.minsi %c8_i32_34, %75 : i32
    %c0_i32_35 = arith.constant 0 : i32
    %77 = arith.cmpi slt, %c0_i32_35, %76 : i32
    %78 = arith.extui %77 : i1 to i32
    %c0_i32_36 = arith.constant 0 : i32
    %79 = arith.cmpi ne, %78, %c0_i32_36 : i32
    scf.if %79 {
      %c0_i32_61 = arith.constant 0 : i32
      %c0_i32_62 = arith.constant 0 : i32
      %130 = tpu.memref_slice %arg9[%c0_i32_61, %c0_i32_62] : memref<128x32xf32, #tpu.memory_space<any>> -> memref<1x32xf32, #tpu.memory_space<any>>
      %c0_i32_63 = arith.constant 0 : i32
      %131 = tpu.memref_slice %arg11[%51, %c0_i32_63] : memref<8x32xf32, #tpu.memory_space<vmem>> -> memref<1x32xf32, #tpu.memory_space<vmem>>
      %132 = tpu.memref_slice %arg12[%49] : memref<1x!tpu.dma_semaphore, #tpu.memory_space<semaphore_mem>> -> memref<1x!tpu.dma_semaphore, #tpu.memory_space<semaphore_mem>>
      %133 = tpu.memref_squeeze %132 : memref<1x!tpu.dma_semaphore, #tpu.memory_space<semaphore_mem>> -> memref<!tpu.dma_semaphore, #tpu.memory_space<semaphore_mem>>
      tpu.wait_dma2 semaphore(%133 : memref<!tpu.dma_semaphore, #tpu.memory_space<semaphore_mem>>) src(%130 : memref<1x32xf32, #tpu.memory_space<any>>) dst(%131 : memref<1x32xf32, #tpu.memory_space<vmem>>)
    } else {
    }
    %c1_i32_37 = arith.constant 1 : i32
    %80 = arith.cmpi slt, %c1_i32_37, %76 : i32
    %81 = arith.extui %80 : i1 to i32
    %c0_i32_38 = arith.constant 0 : i32
    %82 = arith.cmpi ne, %81, %c0_i32_38 : i32
    scf.if %82 {
      %c0_i32_61 = arith.constant 0 : i32
      %c0_i32_62 = arith.constant 0 : i32
      %130 = tpu.memref_slice %arg9[%c0_i32_61, %c0_i32_62] : memref<128x32xf32, #tpu.memory_space<any>> -> memref<1x32xf32, #tpu.memory_space<any>>
      %c0_i32_63 = arith.constant 0 : i32
      %131 = tpu.memref_slice %arg11[%51, %c0_i32_63] : memref<8x32xf32, #tpu.memory_space<vmem>> -> memref<1x32xf32, #tpu.memory_space<vmem>>
      %132 = tpu.memref_slice %arg12[%49] : memref<1x!tpu.dma_semaphore, #tpu.memory_space<semaphore_mem>> -> memref<1x!tpu.dma_semaphore, #tpu.memory_space<semaphore_mem>>
      %133 = tpu.memref_squeeze %132 : memref<1x!tpu.dma_semaphore, #tpu.memory_space<semaphore_mem>> -> memref<!tpu.dma_semaphore, #tpu.memory_space<semaphore_mem>>
      tpu.wait_dma2 semaphore(%133 : memref<!tpu.dma_semaphore, #tpu.memory_space<semaphore_mem>>) src(%130 : memref<1x32xf32, #tpu.memory_space<any>>) dst(%131 : memref<1x32xf32, #tpu.memory_space<vmem>>)
    } else {
    }
    %c2_i32_39 = arith.constant 2 : i32
    %83 = arith.cmpi slt, %c2_i32_39, %76 : i32
    %84 = arith.extui %83 : i1 to i32
    %c0_i32_40 = arith.constant 0 : i32
    %85 = arith.cmpi ne, %84, %c0_i32_40 : i32
    scf.if %85 {
      %c0_i32_61 = arith.constant 0 : i32
      %c0_i32_62 = arith.constant 0 : i32
      %130 = tpu.memref_slice %arg9[%c0_i32_61, %c0_i32_62] : memref<128x32xf32, #tpu.memory_space<any>> -> memref<1x32xf32, #tpu.memory_space<any>>
      %c0_i32_63 = arith.constant 0 : i32
      %131 = tpu.memref_slice %arg11[%51, %c0_i32_63] : memref<8x32xf32, #tpu.memory_space<vmem>> -> memref<1x32xf32, #tpu.memory_space<vmem>>
      %132 = tpu.memref_slice %arg12[%49] : memref<1x!tpu.dma_semaphore, #tpu.memory_space<semaphore_mem>> -> memref<1x!tpu.dma_semaphore, #tpu.memory_space<semaphore_mem>>
      %133 = tpu.memref_squeeze %132 : memref<1x!tpu.dma_semaphore, #tpu.memory_space<semaphore_mem>> -> memref<!tpu.dma_semaphore, #tpu.memory_space<semaphore_mem>>
      tpu.wait_dma2 semaphore(%133 : memref<!tpu.dma_semaphore, #tpu.memory_space<semaphore_mem>>) src(%130 : memref<1x32xf32, #tpu.memory_space<any>>) dst(%131 : memref<1x32xf32, #tpu.memory_space<vmem>>)
    } else {
    }
    %c3_i32_41 = arith.constant 3 : i32
    %86 = arith.cmpi slt, %c3_i32_41, %76 : i32
    %87 = arith.extui %86 : i1 to i32
    %c0_i32_42 = arith.constant 0 : i32
    %88 = arith.cmpi ne, %87, %c0_i32_42 : i32
    scf.if %88 {
      %c0_i32_61 = arith.constant 0 : i32
      %c0_i32_62 = arith.constant 0 : i32
      %130 = tpu.memref_slice %arg9[%c0_i32_61, %c0_i32_62] : memref<128x32xf32, #tpu.memory_space<any>> -> memref<1x32xf32, #tpu.memory_space<any>>
      %c0_i32_63 = arith.constant 0 : i32
      %131 = tpu.memref_slice %arg11[%51, %c0_i32_63] : memref<8x32xf32, #tpu.memory_space<vmem>> -> memref<1x32xf32, #tpu.memory_space<vmem>>
      %132 = tpu.memref_slice %arg12[%49] : memref<1x!tpu.dma_semaphore, #tpu.memory_space<semaphore_mem>> -> memref<1x!tpu.dma_semaphore, #tpu.memory_space<semaphore_mem>>
      %133 = tpu.memref_squeeze %132 : memref<1x!tpu.dma_semaphore, #tpu.memory_space<semaphore_mem>> -> memref<!tpu.dma_semaphore, #tpu.memory_space<semaphore_mem>>
      tpu.wait_dma2 semaphore(%133 : memref<!tpu.dma_semaphore, #tpu.memory_space<semaphore_mem>>) src(%130 : memref<1x32xf32, #tpu.memory_space<any>>) dst(%131 : memref<1x32xf32, #tpu.memory_space<vmem>>)
    } else {
    }
    %c4_i32_43 = arith.constant 4 : i32
    %89 = arith.cmpi slt, %c4_i32_43, %76 : i32
    %90 = arith.extui %89 : i1 to i32
    %c0_i32_44 = arith.constant 0 : i32
    %91 = arith.cmpi ne, %90, %c0_i32_44 : i32
    scf.if %91 {
      %c0_i32_61 = arith.constant 0 : i32
      %c0_i32_62 = arith.constant 0 : i32
      %130 = tpu.memref_slice %arg9[%c0_i32_61, %c0_i32_62] : memref<128x32xf32, #tpu.memory_space<any>> -> memref<1x32xf32, #tpu.memory_space<any>>
      %c0_i32_63 = arith.constant 0 : i32
      %131 = tpu.memref_slice %arg11[%51, %c0_i32_63] : memref<8x32xf32, #tpu.memory_space<vmem>> -> memref<1x32xf32, #tpu.memory_space<vmem>>
      %132 = tpu.memref_slice %arg12[%49] : memref<1x!tpu.dma_semaphore, #tpu.memory_space<semaphore_mem>> -> memref<1x!tpu.dma_semaphore, #tpu.memory_space<semaphore_mem>>
      %133 = tpu.memref_squeeze %132 : memref<1x!tpu.dma_semaphore, #tpu.memory_space<semaphore_mem>> -> memref<!tpu.dma_semaphore, #tpu.memory_space<semaphore_mem>>
      tpu.wait_dma2 semaphore(%133 : memref<!tpu.dma_semaphore, #tpu.memory_space<semaphore_mem>>) src(%130 : memref<1x32xf32, #tpu.memory_space<any>>) dst(%131 : memref<1x32xf32, #tpu.memory_space<vmem>>)
    } else {
    }
    %c5_i32_45 = arith.constant 5 : i32
    %92 = arith.cmpi slt, %c5_i32_45, %76 : i32
    %93 = arith.extui %92 : i1 to i32
    %c0_i32_46 = arith.constant 0 : i32
    %94 = arith.cmpi ne, %93, %c0_i32_46 : i32
    scf.if %94 {
      %c0_i32_61 = arith.constant 0 : i32
      %c0_i32_62 = arith.constant 0 : i32
      %130 = tpu.memref_slice %arg9[%c0_i32_61, %c0_i32_62] : memref<128x32xf32, #tpu.memory_space<any>> -> memref<1x32xf32, #tpu.memory_space<any>>
      %c0_i32_63 = arith.constant 0 : i32
      %131 = tpu.memref_slice %arg11[%51, %c0_i32_63] : memref<8x32xf32, #tpu.memory_space<vmem>> -> memref<1x32xf32, #tpu.memory_space<vmem>>
      %132 = tpu.memref_slice %arg12[%49] : memref<1x!tpu.dma_semaphore, #tpu.memory_space<semaphore_mem>> -> memref<1x!tpu.dma_semaphore, #tpu.memory_space<semaphore_mem>>
      %133 = tpu.memref_squeeze %132 : memref<1x!tpu.dma_semaphore, #tpu.memory_space<semaphore_mem>> -> memref<!tpu.dma_semaphore, #tpu.memory_space<semaphore_mem>>
      tpu.wait_dma2 semaphore(%133 : memref<!tpu.dma_semaphore, #tpu.memory_space<semaphore_mem>>) src(%130 : memref<1x32xf32, #tpu.memory_space<any>>) dst(%131 : memref<1x32xf32, #tpu.memory_space<vmem>>)
    } else {
    }
    %c6_i32_47 = arith.constant 6 : i32
    %95 = arith.cmpi slt, %c6_i32_47, %76 : i32
    %96 = arith.extui %95 : i1 to i32
    %c0_i32_48 = arith.constant 0 : i32
    %97 = arith.cmpi ne, %96, %c0_i32_48 : i32
    scf.if %97 {
      %c0_i32_61 = arith.constant 0 : i32
      %c0_i32_62 = arith.constant 0 : i32
      %130 = tpu.memref_slice %arg9[%c0_i32_61, %c0_i32_62] : memref<128x32xf32, #tpu.memory_space<any>> -> memref<1x32xf32, #tpu.memory_space<any>>
      %c0_i32_63 = arith.constant 0 : i32
      %131 = tpu.memref_slice %arg11[%51, %c0_i32_63] : memref<8x32xf32, #tpu.memory_space<vmem>> -> memref<1x32xf32, #tpu.memory_space<vmem>>
      %132 = tpu.memref_slice %arg12[%49] : memref<1x!tpu.dma_semaphore, #tpu.memory_space<semaphore_mem>> -> memref<1x!tpu.dma_semaphore, #tpu.memory_space<semaphore_mem>>
      %133 = tpu.memref_squeeze %132 : memref<1x!tpu.dma_semaphore, #tpu.memory_space<semaphore_mem>> -> memref<!tpu.dma_semaphore, #tpu.memory_space<semaphore_mem>>
      tpu.wait_dma2 semaphore(%133 : memref<!tpu.dma_semaphore, #tpu.memory_space<semaphore_mem>>) src(%130 : memref<1x32xf32, #tpu.memory_space<any>>) dst(%131 : memref<1x32xf32, #tpu.memory_space<vmem>>)
    } else {
    }
    %c7_i32_49 = arith.constant 7 : i32
    %98 = arith.cmpi slt, %c7_i32_49, %76 : i32
    %99 = arith.extui %98 : i1 to i32
    %c0_i32_50 = arith.constant 0 : i32
    %100 = arith.cmpi ne, %99, %c0_i32_50 : i32
    scf.if %100 {
      %c0_i32_61 = arith.constant 0 : i32
      %c0_i32_62 = arith.constant 0 : i32
      %130 = tpu.memref_slice %arg9[%c0_i32_61, %c0_i32_62] : memref<128x32xf32, #tpu.memory_space<any>> -> memref<1x32xf32, #tpu.memory_space<any>>
      %c0_i32_63 = arith.constant 0 : i32
      %131 = tpu.memref_slice %arg11[%51, %c0_i32_63] : memref<8x32xf32, #tpu.memory_space<vmem>> -> memref<1x32xf32, #tpu.memory_space<vmem>>
      %132 = tpu.memref_slice %arg12[%49] : memref<1x!tpu.dma_semaphore, #tpu.memory_space<semaphore_mem>> -> memref<1x!tpu.dma_semaphore, #tpu.memory_space<semaphore_mem>>
      %133 = tpu.memref_squeeze %132 : memref<1x!tpu.dma_semaphore, #tpu.memory_space<semaphore_mem>> -> memref<!tpu.dma_semaphore, #tpu.memory_space<semaphore_mem>>
      tpu.wait_dma2 semaphore(%133 : memref<!tpu.dma_semaphore, #tpu.memory_space<semaphore_mem>>) src(%130 : memref<1x32xf32, #tpu.memory_space<any>>) dst(%131 : memref<1x32xf32, #tpu.memory_space<vmem>>)
    } else {
    }
    %c8_i32_51 = arith.constant 8 : i32
    %101 = arith.index_cast %51 : i32 to index
    %c0_52 = arith.constant 0 : index
    %102 = vector.load %arg11[%101, %c0_52] : memref<8x32xf32, #tpu.memory_space<vmem>>, vector<8x32xf32>
    %103 = arith.addf %72, %102 : vector<8x32xf32>
    %cst_53 = arith.constant dense<0.000000e+00> : vector<8xf32>
    %104 = vector.multi_reduction <add>, %103, %cst_53 [1] : vector<8x32xf32> to vector<8xf32>
    %105 = vector.shape_cast %104 : vector<8xf32> to vector<8x1xf32>
    %cst_54 = arith.constant 3.200000e+01 : f32
    %106 = vector.broadcast %cst_54 : f32 to vector<8x1xf32>
    %107 = arith.divf %105, %106 : vector<8x1xf32>
    %108 = arith.mulf %103, %103 : vector<8x32xf32>
    %cst_55 = arith.constant dense<0.000000e+00> : vector<8xf32>
    %109 = vector.multi_reduction <add>, %108, %cst_55 [1] : vector<8x32xf32> to vector<8xf32>
    %110 = vector.shape_cast %109 : vector<8xf32> to vector<8x1xf32>
    %cst_56 = arith.constant 3.200000e+01 : f32
    %111 = vector.broadcast %cst_56 : f32 to vector<8x1xf32>
    %112 = arith.divf %110, %111 : vector<8x1xf32>
    %113 = arith.mulf %107, %107 : vector<8x1xf32>
    %114 = arith.subf %112, %113 : vector<8x1xf32>
    %cst_57 = arith.constant 0.000000e+00 : f32
    %115 = vector.broadcast %cst_57 : f32 to vector<8x1xf32>
    %116 = arith.maximumf %114, %115 : vector<8x1xf32>
    %117 = vector.broadcast %107 : vector<8x1xf32> to vector<8x32xf32>
    %118 = arith.subf %103, %117 : vector<8x32xf32>
    %cst_58 = arith.constant 9.99999996E-13 : f32
    %119 = vector.broadcast %cst_58 : f32 to vector<8x1xf32>
    %120 = arith.addf %116, %119 : vector<8x1xf32>
    %121 = math.rsqrt %120 : vector<8x1xf32>
    %122 = vector.broadcast %121 : vector<8x1xf32> to vector<8x32xf32>
    %123 = arith.mulf %118, %122 : vector<8x32xf32>
    %124 = vector.broadcast %42 : vector<1x32xf32> to vector<8x32xf32>
    %125 = arith.mulf %123, %124 : vector<8x32xf32>
    %126 = vector.broadcast %43 : vector<1x32xf32> to vector<8x32xf32>
    %127 = arith.addf %125, %126 : vector<8x32xf32>
    %128 = arith.index_cast %51 : i32 to index
    %c0_59 = arith.constant 0 : index
    %129 = vector.load %arg10[%128, %c0_59] : memref<8x32xf32, #tpu.memory_space<vmem>>, vector<8x32xf32>
    tpu.vector_store %arg10[%128, %c0_59], %127 {strides = array<i32>} : memref<8x32xf32, #tpu.memory_space<vmem>>, vector<8x32xf32>,
    %c1_i32_60 = arith.constant 1 : i32
    return
  }
  func.func @transform_0(%arg0: i32, %arg1: memref<16xi32, #tpu.memory_space<smem>>, %arg2: memref<1xi32, #tpu.memory_space<smem>>) -> (i32, i32) {
    %c0_i32 = arith.constant 0 : i32
    %c0_i32_0 = arith.constant 0 : i32
    return %arg0, %c0_i32 : i32, i32
  }
  func.func @transform_1(%arg0: i32, %arg1: memref<16xi32, #tpu.memory_space<smem>>, %arg2: memref<1xi32, #tpu.memory_space<smem>>) -> (i32, i32) {
    %c0_i32 = arith.constant 0 : i32
    %c0_i32_0 = arith.constant 0 : i32
    return %arg0, %c0_i32 : i32, i32
  }
  func.func @transform_2(%arg0: i32, %arg1: memref<16xi32, #tpu.memory_space<smem>>, %arg2: memref<1xi32, #tpu.memory_space<smem>>) -> (i32, i32) {
    %c0_i32 = arith.constant 0 : i32
    %c0_i32_0 = arith.constant 0 : i32
    %c0_i32_1 = arith.constant 0 : i32
    return %c0_i32, %c0_i32_0 : i32, i32
  }
  func.func @transform_3(%arg0: i32, %arg1: memref<16xi32, #tpu.memory_space<smem>>, %arg2: memref<1xi32, #tpu.memory_space<smem>>) -> (i32, i32) {
    %c0_i32 = arith.constant 0 : i32
    %c0_i32_0 = arith.constant 0 : i32
    %c0_i32_1 = arith.constant 0 : i32
    return %c0_i32, %c0_i32_0 : i32, i32
  }
  func.func @transform_4(%arg0: i32, %arg1: memref<16xi32, #tpu.memory_space<smem>>, %arg2: memref<1xi32, #tpu.memory_space<smem>>) -> (i32, i32) {
    %c0_i32 = arith.constant 0 : i32
    %c0_i32_0 = arith.constant 0 : i32
    %c0_i32_1 = arith.constant 0 : i32
    return %c0_i32, %c0_i32_0 : i32, i32
  }
  func.func @transform_5(%arg0: i32, %arg1: memref<16xi32, #tpu.memory_space<smem>>, %arg2: memref<1xi32, #tpu.memory_space<smem>>) -> (i32, i32) {
    %c0_i32 = arith.constant 0 : i32
    %c0_i32_0 = arith.constant 0 : i32
    %c0_i32_1 = arith.constant 0 : i32
    return %c0_i32, %c0_i32_0 : i32, i32
  }
  func.func @transform_7(%arg0: i32, %arg1: memref<16xi32, #tpu.memory_space<smem>>, %arg2: memref<1xi32, #tpu.memory_space<smem>>) -> (i32, i32) {
    %c0_i32 = arith.constant 0 : i32
    %c0_i32_0 = arith.constant 0 : i32
    return %arg0, %c0_i32 : i32, i32
  }
}

</mosaic_0001>

<llo_original>
// kernel: tpu_custom_call.1
$region0: #{tpu_custom_call.1}
  #allocation0 [shape = 'u32[]', space=smem, size = 0x4, offset = 0x4, fixed_abs, tag = 'smem constant byte address 0x4 - core index']
  #allocation1 [shape = 'u32[144,128]{1,0:T(1,128)}', space=vmem, size = 0x12000, scoped, tag = 'internal scratch']
  #allocation2 [shape = 'f32[8,32]{1,0:T(8,128)}', space=vmem, size = 0x1000, scoped, tag = 'scratch operand']
  #allocation3 [shape = 's32[1]{0}', space=sflag, size = 0x4, scoped, tag = 'scratch operand']
  #allocation4 [shape = 's32[1]{0}', space=sflag, size = 0x4, scoped, tag = 'scoped memory for tpu_custom_call.1']
  #allocation5 [shape = 'u8[512]{0}', space=smem, size = 0x200, scoped, tag = 'prefetched SMEM operand 0']
  #allocation6 [shape = 's32[1]{0:T(128)S(6)}', space=smem, size = 0x200, scoped, tag = 'prefetched SMEM operand 1']
  #allocation9 [shape = 's32[]', space=sflag, size = 0x4, offset = 0, fixed_abs, tag = 'sflag constant byte address 0x0 - dummy sync flag']
  #allocation10 [shape = 's32[]', space=sflag, size = 0x4, offset = 0, fixed_abs, tag = 'sflag constant byte address 0x0 - dummy sync flag']
  #allocation11 [shape = 's32[]', space=sflag, size = 0x4, offset = 0, fixed_abs, tag = 'sflag constant byte address 0x0 - dummy sync flag']
  #allocation12 [shape = 's32[]', space=sflag, size = 0x4, offset = 0, fixed_abs, tag = 'sflag constant byte address 0x0 - dummy sync flag']
  #allocation13 [shape = 's32[]', space=sflag, size = 0x4, offset = 0, fixed_abs, tag = 'sflag constant byte address 0x0 - dummy sync flag']
  #allocation14 [shape = 's32[]', space=sflag, size = 0x4, offset = 0, fixed_abs, tag = 'sflag constant byte address 0x0 - dummy sync flag']
  #allocation15 [shape = 's32[]', space=sflag, size = 0x4, offset = 0, fixed_abs, tag = 'sflag constant byte address 0x0 - dummy sync flag']
  #allocation16 [shape = 's32[]', space=sflag, size = 0x4, offset = 0, fixed_abs, tag = 'sflag constant byte address 0x0 - dummy sync flag']
  %s0 = inlined_call_operand.vmem [shape: s32[16], index: 0, kind: input, shape index: {}]
  %s1 = inlined_call_operand.<no memory space> [shape: s32[1], index: 1, kind: input, shape index: {}]
  %s2 = inlined_call_operand.vmem [shape: s32[16,1], index: 2, kind: input, shape index: {}]
  %s3 = inlined_call_operand.vmem [shape: s32[16,1], index: 3, kind: input, shape index: {}]
  %s4 = inlined_call_operand.vmem [shape: f32[2,32], index: 4, kind: input, shape index: {}]
  %s5 = inlined_call_operand.vmem [shape: f32[64,32], index: 5, kind: input, shape index: {}]
  %s6 = inlined_call_operand.vmem [shape: f32[1,32], index: 6, kind: input, shape index: {}]
  %s7 = inlined_call_operand.vmem [shape: f32[1,32], index: 7, kind: input, shape index: {}]
  %s8 = inlined_call_operand.vmem [shape: f32[128,32], index: 8, kind: input, shape index: {}]
  %s9 = inlined_call_operand.hbm [shape: f32[16,32], index: 9, kind: output, shape index: {}]
  %s10 = sld [smem:[#allocation0]]
  $region361: #{tpu_custom_call.1} parent=0
    _
  %s12 = ssub.s32 1, %s10
  %s13 = scalar_select 0, %s12, %s10
  %s14 = sshll.u32 %s0, 4
  %s15 = int_to_ptr.vmem [resolvable:$true] %s14
  %17 = dma.vmem_to_smem %s15, 16, [#allocation5], [#allocation4]
  %18 = sst [smem:[#allocation6]] %s1
  %19 = dma.done [#allocation4], 16
  %20 = sfence
  $region1: #{tpu_custom_call.1} parent=0
    #allocation7 [shape = 'u8[8192]{0}', space=vmem, size = 0x2000, scoped, tag = 'output window, operand 0']
    #allocation8 [shape = 's32[2]{0}', space=sflag, size = 0x8, scoped, tag = 'scoped memory for tpu_custom_call.1']
    %21 = vsyncpa [#allocation8], 0
    %s22 = scalar_lea.sflag [#allocation8], 1
    %23 = vsyncpa %s22, 0
    loop: start=0, step=1, limit=4
    $region2: #{tpu_custom_call.1} parent=1 // loop_pre_header
      _
    $region3: #{tpu_custom_call.1} parent=1 // loop_header
      %s25 = sphi 0, %s29
      %p26 = scmp.ge.s32.totalorder %s25, 4
      %s35 = sphi 0, %s37
      %s38 = sphi 0, %s35
      %s39 = sphi 0, %s38
      %s55 = sphi 0, %s39
      %s61 = sphi 0, %s63
      %s64 = sphi 0, %s61
      %s65 = sphi 0, %s64
      %s81 = sphi 0, %s65
      %s85 = sphi 0, %s85
      %s87 = sphi 0, %s85
      %s88 = sphi 0, %s87
      %s102 = sphi 0, %s88
      %s106 = sphi 0, %s106
      %s108 = sphi 0, %s106
      %s109 = sphi 0, %s108
      %s123 = sphi 0, %s109
      %s127 = sphi 0, %s127
      %s129 = sphi 0, %s127
      %s130 = sphi 0, %s129
      %s144 = sphi 0, %s130
      %s148 = sphi 0, %s148
      %s150 = sphi 0, %s148
      %s151 = sphi 0, %s150
      %s165 = sphi 0, %s151
      %s171 = sphi 0, %s173
      %s174 = sphi 0, %s171
      %s175 = sphi 0, %s174
      %s191 = sphi 0, %s175
    $region4: #{tpu_custom_call.1} parent=1 // loop_header_branch
      %28 = sbr.rel (%p26) target = $region8
    $region5: #{tpu_custom_call.1} parent=1 // loop_body
      %s30 = ssub.s32 %s25, 1
      %s31 = ssub.s32 %s25, 2
      %s32 = sadd.s32 %s25, 1
      %s33 = ssub.s32 %s25, %s32
      %p34 = scmp.eq.s32.totalorder %s33, 0
      %s36 = sadd.s32 %s35, 1
      %s37 = scalar_select %p34, %s35, %s36
      %p40 = pneg %p34
      %p41 = scmp.eq.s32.totalorder %s25, 1
      %p42 = por %p40, %p41
      %p43 = scmp.ne.s32.totalorder %s35, %s38
      %p44 = scmp.eq.s32.totalorder %s25, 0
      %p45 = por %p43, %p44
      %p46 = scmp.ne.s32.totalorder %s35, %s38
      %p47 = scmp.eq.s32.totalorder %s30, 1
      %p48 = por %p46, %p47
      %p49 = scmp.ne.s32.totalorder %s38, %s39
      %p50 = scmp.eq.s32.totalorder %s30, 0
      %p51 = por %p49, %p50
      %p52 = scmp.ne.s32.totalorder %s38, %s39
      %p53 = scmp.eq.s32.totalorder %s31, 1
      %p54 = por %p52, %p53
      %p56 = scmp.ne.s32.totalorder %s39, %s55
      %p57 = scmp.eq.s32.totalorder %s31, 0
      %p58 = por %p56, %p57
      %s59 = ssub.s32 %s25, %s32
      %p60 = scmp.eq.s32.totalorder %s59, 0
      %s62 = sadd.s32 %s61, 1
      %s63 = scalar_select %p60, %s61, %s62
      %p66 = pneg %p60
      %p67 = scmp.eq.s32.totalorder %s25, 1
      %p68 = por %p66, %p67
      %p69 = scmp.ne.s32.totalorder %s61, %s64
      %p70 = scmp.eq.s32.totalorder %s25, 0
      %p71 = por %p69, %p70
      %p72 = scmp.ne.s32.totalorder %s61, %s64
      %p73 = scmp.eq.s32.totalorder %s30, 1
      %p74 = por %p72, %p73
      %p75 = scmp.ne.s32.totalorder %s64, %s65
      %p76 = scmp.eq.s32.totalorder %s30, 0
      %p77 = por %p75, %p76
      %p78 = scmp.ne.s32.totalorder %s64, %s65
      %p79 = scmp.eq.s32.totalorder %s31, 1
      %p80 = por %p78, %p79
      %p82 = scmp.ne.s32.totalorder %s65, %s81
      %p83 = scmp.eq.s32.totalorder %s31, 0
      %p84 = por %p82, %p83
      %s86 = sadd.s32 %s85, 1
      %p89 = scmp.eq.s32.totalorder %s25, 1
      %p90 = scmp.ne.s32.totalorder %s85, %s87
      %p91 = scmp.eq.s32.totalorder %s25, 0
      %p92 = por %p90, %p91
      %p93 = scmp.ne.s32.totalorder %s85, %s87
      %p94 = scmp.eq.s32.totalorder %s30, 1
      %p95 = por %p93, %p94
      %p96 = scmp.ne.s32.totalorder %s87, %s88
      %p97 = scmp.eq.s32.totalorder %s30, 0
      %p98 = por %p96, %p97
      %p99 = scmp.ne.s32.totalorder %s87, %s88
      %p100 = scmp.eq.s32.totalorder %s31, 1
      %p101 = por %p99, %p100
      %p103 = scmp.ne.s32.totalorder %s88, %s102
      %p104 = scmp.eq.s32.totalorder %s31, 0
      %p105 = por %p103, %p104
      %s107 = sadd.s32 %s106, 1
      %p110 = scmp.eq.s32.totalorder %s25, 1
      %p111 = scmp.ne.s32.totalorder %s106, %s108
      %p112 = scmp.eq.s32.totalorder %s25, 0
      %p113 = por %p111, %p112
      %p114 = scmp.ne.s32.totalorder %s106, %s108
      %p115 = scmp.eq.s32.totalorder %s30, 1
      %p116 = por %p114, %p115
      %p117 = scmp.ne.s32.totalorder %s108, %s109
      %p118 = scmp.eq.s32.totalorder %s30, 0
      %p119 = por %p117, %p118
      %p120 = scmp.ne.s32.totalorder %s108, %s109
      %p121 = scmp.eq.s32.totalorder %s31, 1
      %p122 = por %p120, %p121
      %p124 = scmp.ne.s32.totalorder %s109, %s123
      %p125 = scmp.eq.s32.totalorder %s31, 0
      %p126 = por %p124, %p125
      %s128 = sadd.s32 %s127, 1
      %p131 = scmp.eq.s32.totalorder %s25, 1
      %p132 = scmp.ne.s32.totalorder %s127, %s129
      %p133 = scmp.eq.s32.totalorder %s25, 0
      %p134 = por %p132, %p133
      %p135 = scmp.ne.s32.totalorder %s127, %s129
      %p136 = scmp.eq.s32.totalorder %s30, 1
      %p137 = por %p135, %p136
      %p138 = scmp.ne.s32.totalorder %s129, %s130
      %p139 = scmp.eq.s32.totalorder %s30, 0
      %p140 = por %p138, %p139
      %p141 = scmp.ne.s32.totalorder %s129, %s130
      %p142 = scmp.eq.s32.totalorder %s31, 1
      %p143 = por %p141, %p142
      %p145 = scmp.ne.s32.totalorder %s130, %s144
      %p146 = scmp.eq.s32.totalorder %s31, 0
      %p147 = por %p145, %p146
      %s149 = sadd.s32 %s148, 1
      %p152 = scmp.eq.s32.totalorder %s25, 1
      %p153 = scmp.ne.s32.totalorder %s148, %s150
      %p154 = scmp.eq.s32.totalorder %s25, 0
      %p155 = por %p153, %p154
      %p156 = scmp.ne.s32.totalorder %s148, %s150
      %p157 = scmp.eq.s32.totalorder %s30, 1
      %p158 = por %p156, %p157
      %p159 = scmp.ne.s32.totalorder %s150, %s151
      %p160 = scmp.eq.s32.totalorder %s30, 0
      %p161 = por %p159, %p160
      %p162 = scmp.ne.s32.totalorder %s150, %s151
      %p163 = scmp.eq.s32.totalorder %s31, 1
      %p164 = por %p162, %p163
      %p166 = scmp.ne.s32.totalorder %s151, %s165
      %p167 = scmp.eq.s32.totalorder %s31, 0
      %p168 = por %p166, %p167
      %s169 = ssub.s32 %s25, %s32
      %p170 = scmp.eq.s32.totalorder %s169, 0
      %s172 = sadd.s32 %s171, 1
      %s173 = scalar_select %p170, %s171, %s172
      %p176 = pneg %p170
      %p177 = scmp.eq.s32.totalorder %s25, 1
      %p178 = por %p176, %p177
      %p179 = scmp.ne.s32.totalorder %s171, %s174
      %p180 = scmp.eq.s32.totalorder %s25, 0
      %p181 = por %p179, %p180
      %p182 = scmp.ne.s32.totalorder %s171, %s174
      %p183 = scmp.eq.s32.totalorder %s30, 1
      %p184 = por %p182, %p183
      %p185 = scmp.ne.s32.totalorder %s174, %s175
      %p186 = scmp.eq.s32.totalorder %s30, 0
      %p187 = por %p185, %p186
      %p188 = scmp.ne.s32.totalorder %s174, %s175
      %p189 = scmp.eq.s32.totalorder %s31, 1
      %p190 = por %p188, %p189
      %p192 = scmp.ne.s32.totalorder %s175, %s191
      %p193 = scmp.eq.s32.totalorder %s31, 0
      %p194 = por %p192, %p193
      %p195 = scmp.le.s32.totalorder 1, %s25
      %p196 = scmp.lt.s32.totalorder %s25, 3
      %p197 = pnand %p195, %p196
      %p198 = pneg %p197
      // Predicated region
      $region9: #{tpu_custom_call.1} parent=5 // pred_check
        _
      $region10: #{tpu_custom_call.1} parent=5 // pred_check_branch
        %200 = sbr.rel (%p197) target = $region12
      $region11: #{tpu_custom_call.1} parent=5 // pred_region
        %s201 = ssub.s32 %s25, 1
        // Predicated region
        $region13: #{tpu_custom_call.1} parent=11 // pred_check
          %p202 = pneg %p98
        $region14: #{tpu_custom_call.1} parent=11 // pred_check_branch
          %204 = sbr.rel (%p202) target = $region16
        $region15: #{tpu_custom_call.1} parent=11 // pred_region
          _
        $region16: #{tpu_custom_call.1} parent=11 // pred_fallthru
          _
        // Predicated region
        $region17: #{tpu_custom_call.1} parent=11 // pred_check
          %p205 = pneg %p119
        $region18: #{tpu_custom_call.1} parent=11 // pred_check_branch
          %207 = sbr.rel (%p205) target = $region20
        $region19: #{tpu_custom_call.1} parent=11 // pred_region
          _
        $region20: #{tpu_custom_call.1} parent=11 // pred_fallthru
          _
        // Predicated region
        $region21: #{tpu_custom_call.1} parent=11 // pred_check
          %p208 = pneg %p140
        $region22: #{tpu_custom_call.1} parent=11 // pred_check_branch
          %210 = sbr.rel (%p208) target = $region24
        $region23: #{tpu_custom_call.1} parent=11 // pred_region
          _
        $region24: #{tpu_custom_call.1} parent=11 // pred_fallthru
          _
        // Predicated region
        $region25: #{tpu_custom_call.1} parent=11 // pred_check
          %p211 = pneg %p161
        $region26: #{tpu_custom_call.1} parent=11 // pred_check_branch
          %213 = sbr.rel (%p211) target = $region28
        $region27: #{tpu_custom_call.1} parent=11 // pred_region
          _
        $region28: #{tpu_custom_call.1} parent=11 // pred_fallthru
          _
      $region12: #{tpu_custom_call.1} parent=5 // pred_fallthru
        _
      %p214 = scmp.lt.s32.totalorder %s25, 2
      // Predicated region
      $region29: #{tpu_custom_call.1} parent=5 // pred_check
        %p215 = pneg %p214
      $region30: #{tpu_custom_call.1} parent=5 // pred_check_branch
        %217 = sbr.rel (%p215) target = $region32
      $region31: #{tpu_custom_call.1} parent=5 // pred_region
        // Predicated region
        $region33: #{tpu_custom_call.1} parent=31 // pred_check
          %p218 = pneg %p45
        $region34: #{tpu_custom_call.1} parent=31 // pred_check_branch
          %220 = sbr.rel (%p218) target = $region36
        $region35: #{tpu_custom_call.1} parent=31 // pred_region
          %p221 = scmp.lt.s32.totalorder %s25, 1
          %s222 = scalar_select %p221, %s25, 1
          %s223 = smul.addr %s222, 8
          %s224 = scalar_lea.vmem %s2, %s223
        $region36: #{tpu_custom_call.1} parent=31 // pred_fallthru
          _
        // Predicated region
        $region37: #{tpu_custom_call.1} parent=31 // pred_check
          %p225 = pneg %p71
        $region38: #{tpu_custom_call.1} parent=31 // pred_check_branch
          %227 = sbr.rel (%p225) target = $region40
        $region39: #{tpu_custom_call.1} parent=31 // pred_region
          %p228 = scmp.lt.s32.totalorder %s25, 1
          %s229 = scalar_select %p228, %s25, 1
          %s230 = smul.addr %s229, 8
          %s231 = scalar_lea.vmem %s3, %s230
        $region40: #{tpu_custom_call.1} parent=31 // pred_fallthru
          _
      $region32: #{tpu_custom_call.1} parent=5 // pred_fallthru
        _
      %p232 = scmp.le.s32.totalorder 1, %s25
      %p233 = scmp.lt.s32.totalorder %s25, 3
      %p234 = pnand %p232, %p233
      %p235 = pneg %p234
      // Predicated region
      $region41: #{tpu_custom_call.1} parent=5 // pred_check
        _
      $region42: #{tpu_custom_call.1} parent=5 // pred_check_branch
        %237 = sbr.rel (%p234) target = $region44
      $region43: #{tpu_custom_call.1} parent=5 // pred_region
        %s238 = ssub.s32 %s25, 1
        %p239 = scmp.lt.s32.totalorder %s30, 1
        %s240 = scalar_select %p239, %s30, 1
        %s241 = smul.addr %s240, 8
        %s242 = scalar_lea.vmem %s2, %s241
        %p243 = pneg %p51
        %p244 = pneg %p48
        %p245 = scmp.lt.s32.totalorder %s30, 1
        %s246 = scalar_select %p245, %s30, 1
        %s247 = smul.addr %s246, 8
        %s248 = scalar_lea.vmem %s3, %s247
        %p249 = pneg %p77
        %p250 = pneg %p74
        %p251 = pneg %p98
        %p252 = pneg %p95
        %p253 = pneg %p119
        %p254 = pneg %p116
        %p255 = pneg %p140
        %p256 = pneg %p137
        %p257 = pneg %p161
        %p258 = pneg %p158
        %p259 = pneg %p187
        %p260 = pneg %p184
        %s261 = sand.u32 %s174, 1
        %s262 = scalar_lea.sflag [#allocation8], %s261
        %s263 = sand.u32 %s174, 1
        %s264 = smul.addr %s263, 8
        %s265 = scalar_lea.vmem [#allocation7], %s264
        %p266 = scmp.lt.s32.totalorder %s30, 1
        %s267 = scalar_select %p266, %s30, 1
        %s268 = smul.addr %s267, 8
        %s269 = scalar_lea.vmem %s2, %s268
        %p270 = scmp.lt.s32.totalorder %s30, 1
        %s271 = scalar_select %p270, %s30, 1
        %s272 = smul.addr %s271, 8
        %s273 = scalar_lea.vmem %s3, %s272
        %s274 = smul.u32 %s30, 8
        %s275 = sld [smem:[#allocation6]]
        %p276 = scmp.lt.s32.totalorder %s274, %s275
        // Predicated region
        $region45: #{tpu_custom_call.1} parent=43 // pred_check
          %p277 = pneg %p276
        $region46: #{tpu_custom_call.1} parent=43 // pred_check_branch
          %279 = sbr.rel (%p277) target = $region48
        $region47: #{tpu_custom_call.1} parent=43 // pred_region
          %s280 = sld [smem:[#allocation5 + %s274]]
          %s281 = scalar_lea.vmem %s8, %s280
          %p283 = scmp.lt.u32.totalorder 1, 8
          %p284 = pneg %p283
          // Predicated region
          $region49: #{tpu_custom_call.1} parent=47 // pred_check
            _
          $region50: #{tpu_custom_call.1} parent=47 // pred_check_branch
            %286 = sbr.rel (%p283) target = $region52
          $region51: #{tpu_custom_call.1} parent=47 // pred_region
            %s301 = sand.u32 1, 7
            %p302 = scmp.eq.s32.totalorder %s301, 0
            %p303 = pneg %p302
            // Predicated region
            $region64: #{tpu_custom_call.1} parent=51 // pred_check
              _
            $region65: #{tpu_custom_call.1} parent=51 // pred_check_branch
              %305 = sbr.rel (%p302) target = $region67
            $region66: #{tpu_custom_call.1} parent=51 // pred_region
              %s306 = sand.u32 1, 7
              %s307 = ssub.s32 1, %s306
              %s308 = scalar_lea.vmem %s281, %s307
              %s309 = ssub.s32 1, %s306
              %s310 = scalar_lea.vmem [#allocation2], %s309
              %s311 = sshllo.u32 0, %s306
              loop: start=0, step=1, limit=1
              $region68: #{tpu_custom_call.1} parent=66 // loop_pre_header
                _
              $region69: #{tpu_custom_call.1} parent=66 // loop_header
                %s313 = sphi 0, %s317
                %p314 = scmp.ge.s32.totalorder %s313, 1
                %s318 = sphi %s308, %s308
                %s319 = sphi %s310, %s310
              $region70: #{tpu_custom_call.1} parent=66 // loop_header_branch
                %316 = sbr.rel (%p314) target = $region74
              $region71: #{tpu_custom_call.1} parent=66 // loop_body
                %v320 = vld [vmem:[%s318] sm:%s311]
                %321 = vst [vmem:[%s319] sm:%s311] %v320
              $region72: #{tpu_custom_call.1} parent=66 // loop_footer
                %s317 = sadd.s32 1, %s313
              $region73: #{tpu_custom_call.1} parent=66 // loop_footer_branch
                %312 = sbr.rel target = $region69
              $region74: #{tpu_custom_call.1} parent=66 // loop_exit
                _
            $region67: #{tpu_custom_call.1} parent=51 // pred_fallthru
              _
          $region52: #{tpu_custom_call.1} parent=47 // pred_fallthru
            _
          // Predicated region
          $region53: #{tpu_custom_call.1} parent=47 // pred_check
            %p287 = pneg %p283
          $region54: #{tpu_custom_call.1} parent=47 // pred_check_branch
            %289 = sbr.rel (%p287) target = $region56
          $region55: #{tpu_custom_call.1} parent=47 // pred_region
            %s290 = sshllo.u32 0, 1
            loop: start=0, step=1, limit=1
            $region57: #{tpu_custom_call.1} parent=55 // loop_pre_header
              _
            $region58: #{tpu_custom_call.1} parent=55 // loop_header
              %s292 = sphi 0, %s296
              %p293 = scmp.ge.s32.totalorder %s292, 1
              %s297 = sphi %s281, %s281
              %s298 = sphi [#allocation2], [#allocation2]
            $region59: #{tpu_custom_call.1} parent=55 // loop_header_branch
              %295 = sbr.rel (%p293) target = $region63
            $region60: #{tpu_custom_call.1} parent=55 // loop_body
              %v299 = vld [vmem:[%s297] sm:%s290]
              %300 = vst [vmem:[%s298] sm:%s290] %v299
            $region61: #{tpu_custom_call.1} parent=55 // loop_footer
              %s296 = sadd.s32 1, %s292
            $region62: #{tpu_custom_call.1} parent=55 // loop_footer_branch
              %291 = sbr.rel target = $region58
            $region63: #{tpu_custom_call.1} parent=55 // loop_exit
              _
          $region56: #{tpu_custom_call.1} parent=47 // pred_fallthru
            _
          // Predicated region
          $region75: #{tpu_custom_call.1} parent=47 // pred_check
            _
          $region76: #{tpu_custom_call.1} parent=47 // pred_check_branch
            %324 = sbr.rel (0) target = $region78
          $region77: #{tpu_custom_call.1} parent=47 // pred_region
            %325 = vsyncadd [#allocation3], 16
          $region78: #{tpu_custom_call.1} parent=47 // pred_fallthru
            _
        $region48: #{tpu_custom_call.1} parent=43 // pred_fallthru
          _
        %s326 = sadd.s32 %s274, 1
        %p327 = scmp.lt.s32.totalorder %s326, %s275
        // Predicated region
        $region79: #{tpu_custom_call.1} parent=43 // pred_check
          %p328 = pneg %p327
        $region80: #{tpu_custom_call.1} parent=43 // pred_check_branch
          %330 = sbr.rel (%p328) target = $region82
        $region81: #{tpu_custom_call.1} parent=43 // pred_region
          %s331 = sld [smem:[#allocation5 + %s326]]
          %s332 = scalar_lea.vmem %s8, %s331
          %s333 = scalar_lea.vmem [#allocation2], 1
          %p335 = scmp.lt.u32.totalorder 1, 8
          %p336 = pneg %p335
          // Predicated region
          $region83: #{tpu_custom_call.1} parent=81 // pred_check
            _
          $region84: #{tpu_custom_call.1} parent=81 // pred_check_branch
            %338 = sbr.rel (%p335) target = $region86
          $region85: #{tpu_custom_call.1} parent=81 // pred_region
            %s353 = sand.u32 1, 7
            %p354 = scmp.eq.s32.totalorder %s353, 0
            %p355 = pneg %p354
            // Predicated region
            $region98: #{tpu_custom_call.1} parent=85 // pred_check
              _
            $region99: #{tpu_custom_call.1} parent=85 // pred_check_branch
              %357 = sbr.rel (%p354) target = $region101
            $region100: #{tpu_custom_call.1} parent=85 // pred_region
              %s358 = sand.u32 1, 7
              %s359 = ssub.s32 1, %s358
              %s360 = scalar_lea.vmem %s332, %s359
              %s361 = ssub.s32 1, %s358
              %s362 = scalar_lea.vmem %s333, %s361 [#allocation2]
              %s363 = sshllo.u32 0, %s358
              loop: start=0, step=1, limit=1
              $region102: #{tpu_custom_call.1} parent=100 // loop_pre_header
                _
              $region103: #{tpu_custom_call.1} parent=100 // loop_header
                %s365 = sphi 0, %s369
                %p366 = scmp.ge.s32.totalorder %s365, 1
                %s370 = sphi %s360, %s360
                %s371 = sphi %s362, %s362
              $region104: #{tpu_custom_call.1} parent=100 // loop_header_branch
                %368 = sbr.rel (%p366) target = $region108
              $region105: #{tpu_custom_call.1} parent=100 // loop_body
                %v372 = vld [vmem:[%s370] sm:%s363]
                %373 = vst [vmem:[%s371] sm:%s363] %v372
              $region106: #{tpu_custom_call.1} parent=100 // loop_footer
                %s369 = sadd.s32 1, %s365
              $region107: #{tpu_custom_call.1} parent=100 // loop_footer_branch
                %364 = sbr.rel target = $region103
              $region108: #{tpu_custom_call.1} parent=100 // loop_exit
                _
            $region101: #{tpu_custom_call.1} parent=85 // pred_fallthru
              _
          $region86: #{tpu_custom_call.1} parent=81 // pred_fallthru
            _
          // Predicated region
          $region87: #{tpu_custom_call.1} parent=81 // pred_check
            %p339 = pneg %p335
          $region88: #{tpu_custom_call.1} parent=81 // pred_check_branch
            %341 = sbr.rel (%p339) target = $region90
          $region89: #{tpu_custom_call.1} parent=81 // pred_region
            %s342 = sshllo.u32 0, 1
            loop: start=0, step=1, limit=1
            $region91: #{tpu_custom_call.1} parent=89 // loop_pre_header
              _
            $region92: #{tpu_custom_call.1} parent=89 // loop_header
              %s344 = sphi 0, %s348
              %p345 = scmp.ge.s32.totalorder %s344, 1
              %s349 = sphi %s332, %s332
              %s350 = sphi %s333, %s333
            $region93: #{tpu_custom_call.1} parent=89 // loop_header_branch
              %347 = sbr.rel (%p345) target = $region97
            $region94: #{tpu_custom_call.1} parent=89 // loop_body
              %v351 = vld [vmem:[%s349] sm:%s342]
              %352 = vst [vmem:[%s350] sm:%s342] %v351
            $region95: #{tpu_custom_call.1} parent=89 // loop_footer
              %s348 = sadd.s32 1, %s344
            $region96: #{tpu_custom_call.1} parent=89 // loop_footer_branch
              %343 = sbr.rel target = $region92
            $region97: #{tpu_custom_call.1} parent=89 // loop_exit
              _
          $region90: #{tpu_custom_call.1} parent=81 // pred_fallthru
            _
          // Predicated region
          $region109: #{tpu_custom_call.1} parent=81 // pred_check
            _
          $region110: #{tpu_custom_call.1} parent=81 // pred_check_branch
            %376 = sbr.rel (0) target = $region112
          $region111: #{tpu_custom_call.1} parent=81 // pred_region
            %377 = vsyncadd [#allocation3], 16
          $region112: #{tpu_custom_call.1} parent=81 // pred_fallthru
            _
        $region82: #{tpu_custom_call.1} parent=43 // pred_fallthru
          _
        %s378 = sadd.s32 %s274, 2
        %p379 = scmp.lt.s32.totalorder %s378, %s275
        // Predicated region
        $region113: #{tpu_custom_call.1} parent=43 // pred_check
          %p380 = pneg %p379
        $region114: #{tpu_custom_call.1} parent=43 // pred_check_branch
          %382 = sbr.rel (%p380) target = $region116
        $region115: #{tpu_custom_call.1} parent=43 // pred_region
          %s383 = sld [smem:[#allocation5 + %s378]]
          %s384 = scalar_lea.vmem %s8, %s383
          %s385 = scalar_lea.vmem [#allocation2], 2
          %p387 = scmp.lt.u32.totalorder 1, 8
          %p388 = pneg %p387
          // Predicated region
          $region117: #{tpu_custom_call.1} parent=115 // pred_check
            _
          $region118: #{tpu_custom_call.1} parent=115 // pred_check_branch
            %390 = sbr.rel (%p387) target = $region120
          $region119: #{tpu_custom_call.1} parent=115 // pred_region
            %s405 = sand.u32 1, 7
            %p406 = scmp.eq.s32.totalorder %s405, 0
            %p407 = pneg %p406
            // Predicated region
            $region132: #{tpu_custom_call.1} parent=119 // pred_check
              _
            $region133: #{tpu_custom_call.1} parent=119 // pred_check_branch
              %409 = sbr.rel (%p406) target = $region135
            $region134: #{tpu_custom_call.1} parent=119 // pred_region
              %s410 = sand.u32 1, 7
              %s411 = ssub.s32 1, %s410
              %s412 = scalar_lea.vmem %s384, %s411
              %s413 = ssub.s32 1, %s410
              %s414 = scalar_lea.vmem %s385, %s413 [#allocation2]
              %s415 = sshllo.u32 0, %s410
              loop: start=0, step=1, limit=1
              $region136: #{tpu_custom_call.1} parent=134 // loop_pre_header
                _
              $region137: #{tpu_custom_call.1} parent=134 // loop_header
                %s417 = sphi 0, %s421
                %p418 = scmp.ge.s32.totalorder %s417, 1
                %s422 = sphi %s412, %s412
                %s423 = sphi %s414, %s414
              $region138: #{tpu_custom_call.1} parent=134 // loop_header_branch
                %420 = sbr.rel (%p418) target = $region142
              $region139: #{tpu_custom_call.1} parent=134 // loop_body
                %v424 = vld [vmem:[%s422] sm:%s415]
                %425 = vst [vmem:[%s423] sm:%s415] %v424
              $region140: #{tpu_custom_call.1} parent=134 // loop_footer
                %s421 = sadd.s32 1, %s417
              $region141: #{tpu_custom_call.1} parent=134 // loop_footer_branch
                %416 = sbr.rel target = $region137
              $region142: #{tpu_custom_call.1} parent=134 // loop_exit
                _
            $region135: #{tpu_custom_call.1} parent=119 // pred_fallthru
              _
          $region120: #{tpu_custom_call.1} parent=115 // pred_fallthru
            _
          // Predicated region
          $region121: #{tpu_custom_call.1} parent=115 // pred_check
            %p391 = pneg %p387
          $region122: #{tpu_custom_call.1} parent=115 // pred_check_branch
            %393 = sbr.rel (%p391) target = $region124
          $region123: #{tpu_custom_call.1} parent=115 // pred_region
            %s394 = sshllo.u32 0, 1
            loop: start=0, step=1, limit=1
            $region125: #{tpu_custom_call.1} parent=123 // loop_pre_header
              _
            $region126: #{tpu_custom_call.1} parent=123 // loop_header
              %s396 = sphi 0, %s400
              %p397 = scmp.ge.s32.totalorder %s396, 1
              %s401 = sphi %s384, %s384
              %s402 = sphi %s385, %s385
            $region127: #{tpu_custom_call.1} parent=123 // loop_header_branch
              %399 = sbr.rel (%p397) target = $region131
            $region128: #{tpu_custom_call.1} parent=123 // loop_body
              %v403 = vld [vmem:[%s401] sm:%s394]
              %404 = vst [vmem:[%s402] sm:%s394] %v403
            $region129: #{tpu_custom_call.1} parent=123 // loop_footer
              %s400 = sadd.s32 1, %s396
            $region130: #{tpu_custom_call.1} parent=123 // loop_footer_branch
              %395 = sbr.rel target = $region126
            $region131: #{tpu_custom_call.1} parent=123 // loop_exit
              _
          $region124: #{tpu_custom_call.1} parent=115 // pred_fallthru
            _
          // Predicated region
          $region143: #{tpu_custom_call.1} parent=115 // pred_check
            _
          $region144: #{tpu_custom_call.1} parent=115 // pred_check_branch
            %428 = sbr.rel (0) target = $region146
          $region145: #{tpu_custom_call.1} parent=115 // pred_region
            %429 = vsyncadd [#allocation3], 16
          $region146: #{tpu_custom_call.1} parent=115 // pred_fallthru
            _
        $region116: #{tpu_custom_call.1} parent=43 // pred_fallthru
          _
        %s430 = sadd.s32 %s274, 3
        %p431 = scmp.lt.s32.totalorder %s430, %s275
        // Predicated region
        $region147: #{tpu_custom_call.1} parent=43 // pred_check
          %p432 = pneg %p431
        $region148: #{tpu_custom_call.1} parent=43 // pred_check_branch
          %434 = sbr.rel (%p432) target = $region150
        $region149: #{tpu_custom_call.1} parent=43 // pred_region
          %s435 = sld [smem:[#allocation5 + %s430]]
          %s436 = scalar_lea.vmem %s8, %s435
          %s437 = scalar_lea.vmem [#allocation2], 3
          %p439 = scmp.lt.u32.totalorder 1, 8
          %p440 = pneg %p439
          // Predicated region
          $region151: #{tpu_custom_call.1} parent=149 // pred_check
            _
          $region152: #{tpu_custom_call.1} parent=149 // pred_check_branch
            %442 = sbr.rel (%p439) target = $region154
          $region153: #{tpu_custom_call.1} parent=149 // pred_region
            %s457 = sand.u32 1, 7
            %p458 = scmp.eq.s32.totalorder %s457, 0
            %p459 = pneg %p458
            // Predicated region
            $region166: #{tpu_custom_call.1} parent=153 // pred_check
              _
            $region167: #{tpu_custom_call.1} parent=153 // pred_check_branch
              %461 = sbr.rel (%p458) target = $region169
            $region168: #{tpu_custom_call.1} parent=153 // pred_region
              %s462 = sand.u32 1, 7
              %s463 = ssub.s32 1, %s462
              %s464 = scalar_lea.vmem %s436, %s463
              %s465 = ssub.s32 1, %s462
              %s466 = scalar_lea.vmem %s437, %s465 [#allocation2]
              %s467 = sshllo.u32 0, %s462
              loop: start=0, step=1, limit=1
              $region170: #{tpu_custom_call.1} parent=168 // loop_pre_header
                _
              $region171: #{tpu_custom_call.1} parent=168 // loop_header
                %s469 = sphi 0, %s473
                %p470 = scmp.ge.s32.totalorder %s469, 1
                %s474 = sphi %s464, %s464
                %s475 = sphi %s466, %s466
              $region172: #{tpu_custom_call.1} parent=168 // loop_header_branch
                %472 = sbr.rel (%p470) target = $region176
              $region173: #{tpu_custom_call.1} parent=168 // loop_body
                %v476 = vld [vmem:[%s474] sm:%s467]
                %477 = vst [vmem:[%s475] sm:%s467] %v476
              $region174: #{tpu_custom_call.1} parent=168 // loop_footer
                %s473 = sadd.s32 1, %s469
              $region175: #{tpu_custom_call.1} parent=168 // loop_footer_branch
                %468 = sbr.rel target = $region171
              $region176: #{tpu_custom_call.1} parent=168 // loop_exit
                _
            $region169: #{tpu_custom_call.1} parent=153 // pred_fallthru
              _
          $region154: #{tpu_custom_call.1} parent=149 // pred_fallthru
            _
          // Predicated region
          $region155: #{tpu_custom_call.1} parent=149 // pred_check
            %p443 = pneg %p439
          $region156: #{tpu_custom_call.1} parent=149 // pred_check_branch
            %445 = sbr.rel (%p443) target = $region158
          $region157: #{tpu_custom_call.1} parent=149 // pred_region
            %s446 = sshllo.u32 0, 1
            loop: start=0, step=1, limit=1
            $region159: #{tpu_custom_call.1} parent=157 // loop_pre_header
              _
            $region160: #{tpu_custom_call.1} parent=157 // loop_header
              %s448 = sphi 0, %s452
              %p449 = scmp.ge.s32.totalorder %s448, 1
              %s453 = sphi %s436, %s436
              %s454 = sphi %s437, %s437
            $region161: #{tpu_custom_call.1} parent=157 // loop_header_branch
              %451 = sbr.rel (%p449) target = $region165
            $region162: #{tpu_custom_call.1} parent=157 // loop_body
              %v455 = vld [vmem:[%s453] sm:%s446]
              %456 = vst [vmem:[%s454] sm:%s446] %v455
            $region163: #{tpu_custom_call.1} parent=157 // loop_footer
              %s452 = sadd.s32 1, %s448
            $region164: #{tpu_custom_call.1} parent=157 // loop_footer_branch
              %447 = sbr.rel target = $region160
            $region165: #{tpu_custom_call.1} parent=157 // loop_exit
              _
          $region158: #{tpu_custom_call.1} parent=149 // pred_fallthru
            _
          // Predicated region
          $region177: #{tpu_custom_call.1} parent=149 // pred_check
            _
          $region178: #{tpu_custom_call.1} parent=149 // pred_check_branch
            %480 = sbr.rel (0) target = $region180
          $region179: #{tpu_custom_call.1} parent=149 // pred_region
            %481 = vsyncadd [#allocation3], 16
          $region180: #{tpu_custom_call.1} parent=149 // pred_fallthru
            _
        $region150: #{tpu_custom_call.1} parent=43 // pred_fallthru
          _
        %s482 = sadd.s32 %s274, 4
        %p483 = scmp.lt.s32.totalorder %s482, %s275
        // Predicated region
        $region181: #{tpu_custom_call.1} parent=43 // pred_check
          %p484 = pneg %p483
        $region182: #{tpu_custom_call.1} parent=43 // pred_check_branch
          %486 = sbr.rel (%p484) target = $region184
        $region183: #{tpu_custom_call.1} parent=43 // pred_region
          %s487 = sld [smem:[#allocation5 + %s482]]
          %s488 = scalar_lea.vmem %s8, %s487
          %s489 = scalar_lea.vmem [#allocation2], 4
          %p491 = scmp.lt.u32.totalorder 1, 8
          %p492 = pneg %p491
          // Predicated region
          $region185: #{tpu_custom_call.1} parent=183 // pred_check
            _
          $region186: #{tpu_custom_call.1} parent=183 // pred_check_branch
            %494 = sbr.rel (%p491) target = $region188
          $region187: #{tpu_custom_call.1} parent=183 // pred_region
            %s509 = sand.u32 1, 7
            %p510 = scmp.eq.s32.totalorder %s509, 0
            %p511 = pneg %p510
            // Predicated region
            $region200: #{tpu_custom_call.1} parent=187 // pred_check
              _
            $region201: #{tpu_custom_call.1} parent=187 // pred_check_branch
              %513 = sbr.rel (%p510) target = $region203
            $region202: #{tpu_custom_call.1} parent=187 // pred_region
              %s514 = sand.u32 1, 7
              %s515 = ssub.s32 1, %s514
              %s516 = scalar_lea.vmem %s488, %s515
              %s517 = ssub.s32 1, %s514
              %s518 = scalar_lea.vmem %s489, %s517 [#allocation2]
              %s519 = sshllo.u32 0, %s514
              loop: start=0, step=1, limit=1
              $region204: #{tpu_custom_call.1} parent=202 // loop_pre_header
                _
              $region205: #{tpu_custom_call.1} parent=202 // loop_header
                %s521 = sphi 0, %s525
                %p522 = scmp.ge.s32.totalorder %s521, 1
                %s526 = sphi %s516, %s516
                %s527 = sphi %s518, %s518
              $region206: #{tpu_custom_call.1} parent=202 // loop_header_branch
                %524 = sbr.rel (%p522) target = $region210
              $region207: #{tpu_custom_call.1} parent=202 // loop_body
                %v528 = vld [vmem:[%s526] sm:%s519]
                %529 = vst [vmem:[%s527] sm:%s519] %v528
              $region208: #{tpu_custom_call.1} parent=202 // loop_footer
                %s525 = sadd.s32 1, %s521
              $region209: #{tpu_custom_call.1} parent=202 // loop_footer_branch
                %520 = sbr.rel target = $region205
              $region210: #{tpu_custom_call.1} parent=202 // loop_exit
                _
            $region203: #{tpu_custom_call.1} parent=187 // pred_fallthru
              _
          $region188: #{tpu_custom_call.1} parent=183 // pred_fallthru
            _
          // Predicated region
          $region189: #{tpu_custom_call.1} parent=183 // pred_check
            %p495 = pneg %p491
          $region190: #{tpu_custom_call.1} parent=183 // pred_check_branch
            %497 = sbr.rel (%p495) target = $region192
          $region191: #{tpu_custom_call.1} parent=183 // pred_region
            %s498 = sshllo.u32 0, 1
            loop: start=0, step=1, limit=1
            $region193: #{tpu_custom_call.1} parent=191 // loop_pre_header
              _
            $region194: #{tpu_custom_call.1} parent=191 // loop_header
              %s500 = sphi 0, %s504
              %p501 = scmp.ge.s32.totalorder %s500, 1
              %s505 = sphi %s488, %s488
              %s506 = sphi %s489, %s489
            $region195: #{tpu_custom_call.1} parent=191 // loop_header_branch
              %503 = sbr.rel (%p501) target = $region199
            $region196: #{tpu_custom_call.1} parent=191 // loop_body
              %v507 = vld [vmem:[%s505] sm:%s498]
              %508 = vst [vmem:[%s506] sm:%s498] %v507
            $region197: #{tpu_custom_call.1} parent=191 // loop_footer
              %s504 = sadd.s32 1, %s500
            $region198: #{tpu_custom_call.1} parent=191 // loop_footer_branch
              %499 = sbr.rel target = $region194
            $region199: #{tpu_custom_call.1} parent=191 // loop_exit
              _
          $region192: #{tpu_custom_call.1} parent=183 // pred_fallthru
            _
          // Predicated region
          $region211: #{tpu_custom_call.1} parent=183 // pred_check
            _
          $region212: #{tpu_custom_call.1} parent=183 // pred_check_branch
            %532 = sbr.rel (0) target = $region214
          $region213: #{tpu_custom_call.1} parent=183 // pred_region
            %533 = vsyncadd [#allocation3], 16
          $region214: #{tpu_custom_call.1} parent=183 // pred_fallthru
            _
        $region184: #{tpu_custom_call.1} parent=43 // pred_fallthru
          _
        %s534 = sadd.s32 %s274, 5
        %p535 = scmp.lt.s32.totalorder %s534, %s275
        // Predicated region
        $region215: #{tpu_custom_call.1} parent=43 // pred_check
          %p536 = pneg %p535
        $region216: #{tpu_custom_call.1} parent=43 // pred_check_branch
          %538 = sbr.rel (%p536) target = $region218
        $region217: #{tpu_custom_call.1} parent=43 // pred_region
          %s539 = sld [smem:[#allocation5 + %s534]]
          %s540 = scalar_lea.vmem %s8, %s539
          %s541 = scalar_lea.vmem [#allocation2], 5
          %p543 = scmp.lt.u32.totalorder 1, 8
          %p544 = pneg %p543
          // Predicated region
          $region219: #{tpu_custom_call.1} parent=217 // pred_check
            _
          $region220: #{tpu_custom_call.1} parent=217 // pred_check_branch
            %546 = sbr.rel (%p543) target = $region222
          $region221: #{tpu_custom_call.1} parent=217 // pred_region
            %s561 = sand.u32 1, 7
            %p562 = scmp.eq.s32.totalorder %s561, 0
            %p563 = pneg %p562
            // Predicated region
            $region234: #{tpu_custom_call.1} parent=221 // pred_check
              _
            $region235: #{tpu_custom_call.1} parent=221 // pred_check_branch
              %565 = sbr.rel (%p562) target = $region237
            $region236: #{tpu_custom_call.1} parent=221 // pred_region
              %s566 = sand.u32 1, 7
              %s567 = ssub.s32 1, %s566
              %s568 = scalar_lea.vmem %s540, %s567
              %s569 = ssub.s32 1, %s566
              %s570 = scalar_lea.vmem %s541, %s569 [#allocation2]
              %s571 = sshllo.u32 0, %s566
              loop: start=0, step=1, limit=1
              $region238: #{tpu_custom_call.1} parent=236 // loop_pre_header
                _
              $region239: #{tpu_custom_call.1} parent=236 // loop_header
                %s573 = sphi 0, %s577
                %p574 = scmp.ge.s32.totalorder %s573, 1
                %s578 = sphi %s568, %s568
                %s579 = sphi %s570, %s570
              $region240: #{tpu_custom_call.1} parent=236 // loop_header_branch
                %576 = sbr.rel (%p574) target = $region244
              $region241: #{tpu_custom_call.1} parent=236 // loop_body
                %v580 = vld [vmem:[%s578] sm:%s571]
                %581 = vst [vmem:[%s579] sm:%s571] %v580
              $region242: #{tpu_custom_call.1} parent=236 // loop_footer
                %s577 = sadd.s32 1, %s573
              $region243: #{tpu_custom_call.1} parent=236 // loop_footer_branch
                %572 = sbr.rel target = $region239
              $region244: #{tpu_custom_call.1} parent=236 // loop_exit
                _
            $region237: #{tpu_custom_call.1} parent=221 // pred_fallthru
              _
          $region222: #{tpu_custom_call.1} parent=217 // pred_fallthru
            _
          // Predicated region
          $region223: #{tpu_custom_call.1} parent=217 // pred_check
            %p547 = pneg %p543
          $region224: #{tpu_custom_call.1} parent=217 // pred_check_branch
            %549 = sbr.rel (%p547) target = $region226
          $region225: #{tpu_custom_call.1} parent=217 // pred_region
            %s550 = sshllo.u32 0, 1
            loop: start=0, step=1, limit=1
            $region227: #{tpu_custom_call.1} parent=225 // loop_pre_header
              _
            $region228: #{tpu_custom_call.1} parent=225 // loop_header
              %s552 = sphi 0, %s556
              %p553 = scmp.ge.s32.totalorder %s552, 1
              %s557 = sphi %s540, %s540
              %s558 = sphi %s541, %s541
            $region229: #{tpu_custom_call.1} parent=225 // loop_header_branch
              %555 = sbr.rel (%p553) target = $region233
            $region230: #{tpu_custom_call.1} parent=225 // loop_body
              %v559 = vld [vmem:[%s557] sm:%s550]
              %560 = vst [vmem:[%s558] sm:%s550] %v559
            $region231: #{tpu_custom_call.1} parent=225 // loop_footer
              %s556 = sadd.s32 1, %s552
            $region232: #{tpu_custom_call.1} parent=225 // loop_footer_branch
              %551 = sbr.rel target = $region228
            $region233: #{tpu_custom_call.1} parent=225 // loop_exit
              _
          $region226: #{tpu_custom_call.1} parent=217 // pred_fallthru
            _
          // Predicated region
          $region245: #{tpu_custom_call.1} parent=217 // pred_check
            _
          $region246: #{tpu_custom_call.1} parent=217 // pred_check_branch
            %584 = sbr.rel (0) target = $region248
          $region247: #{tpu_custom_call.1} parent=217 // pred_region
            %585 = vsyncadd [#allocation3], 16
          $region248: #{tpu_custom_call.1} parent=217 // pred_fallthru
            _
        $region218: #{tpu_custom_call.1} parent=43 // pred_fallthru
          _
        %s586 = sadd.s32 %s274, 6
        %p587 = scmp.lt.s32.totalorder %s586, %s275
        // Predicated region
        $region249: #{tpu_custom_call.1} parent=43 // pred_check
          %p588 = pneg %p587
        $region250: #{tpu_custom_call.1} parent=43 // pred_check_branch
          %590 = sbr.rel (%p588) target = $region252
        $region251: #{tpu_custom_call.1} parent=43 // pred_region
          %s591 = sld [smem:[#allocation5 + %s586]]
          %s592 = scalar_lea.vmem %s8, %s591
          %s593 = scalar_lea.vmem [#allocation2], 6
          %p595 = scmp.lt.u32.totalorder 1, 8
          %p596 = pneg %p595
          // Predicated region
          $region253: #{tpu_custom_call.1} parent=251 // pred_check
            _
          $region254: #{tpu_custom_call.1} parent=251 // pred_check_branch
            %598 = sbr.rel (%p595) target = $region256
          $region255: #{tpu_custom_call.1} parent=251 // pred_region
            %s613 = sand.u32 1, 7
            %p614 = scmp.eq.s32.totalorder %s613, 0
            %p615 = pneg %p614
            // Predicated region
            $region268: #{tpu_custom_call.1} parent=255 // pred_check
              _
            $region269: #{tpu_custom_call.1} parent=255 // pred_check_branch
              %617 = sbr.rel (%p614) target = $region271
            $region270: #{tpu_custom_call.1} parent=255 // pred_region
              %s618 = sand.u32 1, 7
              %s619 = ssub.s32 1, %s618
              %s620 = scalar_lea.vmem %s592, %s619
              %s621 = ssub.s32 1, %s618
              %s622 = scalar_lea.vmem %s593, %s621 [#allocation2]
              %s623 = sshllo.u32 0, %s618
              loop: start=0, step=1, limit=1
              $region272: #{tpu_custom_call.1} parent=270 // loop_pre_header
                _
              $region273: #{tpu_custom_call.1} parent=270 // loop_header
                %s625 = sphi 0, %s629
                %p626 = scmp.ge.s32.totalorder %s625, 1
                %s630 = sphi %s620, %s620
                %s631 = sphi %s622, %s622
              $region274: #{tpu_custom_call.1} parent=270 // loop_header_branch
                %628 = sbr.rel (%p626) target = $region278
              $region275: #{tpu_custom_call.1} parent=270 // loop_body
                %v632 = vld [vmem:[%s630] sm:%s623]
                %633 = vst [vmem:[%s631] sm:%s623] %v632
              $region276: #{tpu_custom_call.1} parent=270 // loop_footer
                %s629 = sadd.s32 1, %s625
              $region277: #{tpu_custom_call.1} parent=270 // loop_footer_branch
                %624 = sbr.rel target = $region273
              $region278: #{tpu_custom_call.1} parent=270 // loop_exit
                _
            $region271: #{tpu_custom_call.1} parent=255 // pred_fallthru
              _
          $region256: #{tpu_custom_call.1} parent=251 // pred_fallthru
            _
          // Predicated region
          $region257: #{tpu_custom_call.1} parent=251 // pred_check
            %p599 = pneg %p595
          $region258: #{tpu_custom_call.1} parent=251 // pred_check_branch
            %601 = sbr.rel (%p599) target = $region260
          $region259: #{tpu_custom_call.1} parent=251 // pred_region
            %s602 = sshllo.u32 0, 1
            loop: start=0, step=1, limit=1
            $region261: #{tpu_custom_call.1} parent=259 // loop_pre_header
              _
            $region262: #{tpu_custom_call.1} parent=259 // loop_header
              %s604 = sphi 0, %s608
              %p605 = scmp.ge.s32.totalorder %s604, 1
              %s609 = sphi %s592, %s592
              %s610 = sphi %s593, %s593
            $region263: #{tpu_custom_call.1} parent=259 // loop_header_branch
              %607 = sbr.rel (%p605) target = $region267
            $region264: #{tpu_custom_call.1} parent=259 // loop_body
              %v611 = vld [vmem:[%s609] sm:%s602]
              %612 = vst [vmem:[%s610] sm:%s602] %v611
            $region265: #{tpu_custom_call.1} parent=259 // loop_footer
              %s608 = sadd.s32 1, %s604
            $region266: #{tpu_custom_call.1} parent=259 // loop_footer_branch
              %603 = sbr.rel target = $region262
            $region267: #{tpu_custom_call.1} parent=259 // loop_exit
              _
          $region260: #{tpu_custom_call.1} parent=251 // pred_fallthru
            _
          // Predicated region
          $region279: #{tpu_custom_call.1} parent=251 // pred_check
            _
          $region280: #{tpu_custom_call.1} parent=251 // pred_check_branch
            %636 = sbr.rel (0) target = $region282
          $region281: #{tpu_custom_call.1} parent=251 // pred_region
            %637 = vsyncadd [#allocation3], 16
          $region282: #{tpu_custom_call.1} parent=251 // pred_fallthru
            _
        $region252: #{tpu_custom_call.1} parent=43 // pred_fallthru
          _
        %s638 = sadd.s32 %s274, 7
        %p639 = scmp.lt.s32.totalorder %s638, %s275
        // Predicated region
        $region283: #{tpu_custom_call.1} parent=43 // pred_check
          %p640 = pneg %p639
        $region284: #{tpu_custom_call.1} parent=43 // pred_check_branch
          %642 = sbr.rel (%p640) target = $region286
        $region285: #{tpu_custom_call.1} parent=43 // pred_region
          %s643 = sld [smem:[#allocation5 + %s638]]
          %s644 = scalar_lea.vmem %s8, %s643
          %s645 = scalar_lea.vmem [#allocation2], 7
          %p647 = scmp.lt.u32.totalorder 1, 8
          %p648 = pneg %p647
          // Predicated region
          $region287: #{tpu_custom_call.1} parent=285 // pred_check
            _
          $region288: #{tpu_custom_call.1} parent=285 // pred_check_branch
            %650 = sbr.rel (%p647) target = $region290
          $region289: #{tpu_custom_call.1} parent=285 // pred_region
            %s665 = sand.u32 1, 7
            %p666 = scmp.eq.s32.totalorder %s665, 0
            %p667 = pneg %p666
            // Predicated region
            $region302: #{tpu_custom_call.1} parent=289 // pred_check
              _
            $region303: #{tpu_custom_call.1} parent=289 // pred_check_branch
              %669 = sbr.rel (%p666) target = $region305
            $region304: #{tpu_custom_call.1} parent=289 // pred_region
              %s670 = sand.u32 1, 7
              %s671 = ssub.s32 1, %s670
              %s672 = scalar_lea.vmem %s644, %s671
              %s673 = ssub.s32 1, %s670
              %s674 = scalar_lea.vmem %s645, %s673 [#allocation2]
              %s675 = sshllo.u32 0, %s670
              loop: start=0, step=1, limit=1
              $region306: #{tpu_custom_call.1} parent=304 // loop_pre_header
                _
              $region307: #{tpu_custom_call.1} parent=304 // loop_header
                %s677 = sphi 0, %s681
                %p678 = scmp.ge.s32.totalorder %s677, 1
                %s682 = sphi %s672, %s672
                %s683 = sphi %s674, %s674
              $region308: #{tpu_custom_call.1} parent=304 // loop_header_branch
                %680 = sbr.rel (%p678) target = $region312
              $region309: #{tpu_custom_call.1} parent=304 // loop_body
                %v684 = vld [vmem:[%s682] sm:%s675]
                %685 = vst [vmem:[%s683] sm:%s675] %v684
              $region310: #{tpu_custom_call.1} parent=304 // loop_footer
                %s681 = sadd.s32 1, %s677
              $region311: #{tpu_custom_call.1} parent=304 // loop_footer_branch
                %676 = sbr.rel target = $region307
              $region312: #{tpu_custom_call.1} parent=304 // loop_exit
                _
            $region305: #{tpu_custom_call.1} parent=289 // pred_fallthru
              _
          $region290: #{tpu_custom_call.1} parent=285 // pred_fallthru
            _
          // Predicated region
          $region291: #{tpu_custom_call.1} parent=285 // pred_check
            %p651 = pneg %p647
          $region292: #{tpu_custom_call.1} parent=285 // pred_check_branch
            %653 = sbr.rel (%p651) target = $region294
          $region293: #{tpu_custom_call.1} parent=285 // pred_region
            %s654 = sshllo.u32 0, 1
            loop: start=0, step=1, limit=1
            $region295: #{tpu_custom_call.1} parent=293 // loop_pre_header
              _
            $region296: #{tpu_custom_call.1} parent=293 // loop_header
              %s656 = sphi 0, %s660
              %p657 = scmp.ge.s32.totalorder %s656, 1
              %s661 = sphi %s644, %s644
              %s662 = sphi %s645, %s645
            $region297: #{tpu_custom_call.1} parent=293 // loop_header_branch
              %659 = sbr.rel (%p657) target = $region301
            $region298: #{tpu_custom_call.1} parent=293 // loop_body
              %v663 = vld [vmem:[%s661] sm:%s654]
              %664 = vst [vmem:[%s662] sm:%s654] %v663
            $region299: #{tpu_custom_call.1} parent=293 // loop_footer
              %s660 = sadd.s32 1, %s656
            $region300: #{tpu_custom_call.1} parent=293 // loop_footer_branch
              %655 = sbr.rel target = $region296
            $region301: #{tpu_custom_call.1} parent=293 // loop_exit
              _
          $region294: #{tpu_custom_call.1} parent=285 // pred_fallthru
            _
          // Predicated region
          $region313: #{tpu_custom_call.1} parent=285 // pred_check
            _
          $region314: #{tpu_custom_call.1} parent=285 // pred_check_branch
            %688 = sbr.rel (0) target = $region316
          $region315: #{tpu_custom_call.1} parent=285 // pred_region
            %689 = vsyncadd [#allocation3], 16
          $region316: #{tpu_custom_call.1} parent=285 // pred_fallthru
            _
        $region286: #{tpu_custom_call.1} parent=43 // pred_fallthru
          _
        %v690 = vld [vmem:[%s6] sm:$0x1]
        %v691 = vld [vmem:[%s7] sm:$0x1]
        %v692 = vld [vmem:[%s4] sm:$0x1]
        %v693 = vld [vmem:[%s4 + $0x1] sm:$0x1]
        %v694 = vld [vmem:[%s269] sm:$0xff]
        %v695 = vld [vmem:[%s273] sm:$0xff]
        %v696 = vlaneseq
        %v697 = vand.u32 %v696, 127
        %698 = vset.pattern.permute.xlu0 0
        %699 = vperm.xlu0 %698, %v694
        %v700 = vpop.permute.xlu0 %699
        %vm701 = vcmp.eq.s32.totalorder %v700, %v697
        %v702 = vsel %vm701, 1, 0
        %v703 = vcvt.s32.f32 %v702
        %v704 = vld [vmem:[%s5] sm:$0xff]
        %v705 = vld [vmem:[%s5 + $0x8] sm:$0xff]
        %v706 = vld [vmem:[%s5 + $0x10] sm:$0xff]
        %v707 = vld [vmem:[%s5 + $0x18] sm:$0xff]
        %v708 = vld [vmem:[%s5 + $0x20] sm:$0xff]
        %v709 = vld [vmem:[%s5 + $0x28] sm:$0xff]
        %v710 = vld [vmem:[%s5 + $0x30] sm:$0xff]
        %v711 = vld [vmem:[%s5 + $0x38] sm:$0xff]
        %vm712 = vcmp.eq.s32.totalorder %v695, 0
        %v713 = vsel %vm712, 1, 0
        %714 = vset.pattern.permute.xlu0 0
        %715 = vperm.xlu0 %714, %v713
        %v716 = vpop.permute.xlu0 %715
        %vm717 = vcmp.eq.s32.totalorder %v716, 1
        %v718 = vlaneseq
        %v719 = vshrl.u32 %v718, 7
        %v720 = vsub.s32 0, %v719
        %v721 = vrot.slane %v692, %v720
        %v722 = vlaneseq
        %v723 = vshrl.u32 %v722, 7
        %v724 = vsub.s32 0, %v723
        %v725 = vrot.slane %v693, %v724
        %v726 = vsel %vm717, %v721, %v725
        %vm727 = vcmask 523264
        %v729 = vsel %vm727, %v703, 0
        %731 = vmatprep.subr.mxu0 0.0
        %732 = vmatpush1.msra.mxu0 %v704
        %733 = vmatprep.subr.mxu0 0.0
        %734 = vmatpush1.msra.mxu0 %v705
        %735 = vmatprep.subr.mxu0 0.0
        %736 = vmatpush1.msra.mxu0 %v706
        %737 = vmatprep.subr.mxu0 0.0
        %738 = vmatpush1.msra.mxu0 %v707
        %739 = vmatprep.subr.mxu0 0.0
        %740 = vmatpush1.msra.mxu0 %v708
        %741 = vmatprep.subr.mxu0 0.0
        %742 = vmatpush1.msra.mxu0 %v709
        %743 = vmatprep.subr.mxu0 0.0
        %744 = vmatpush1.msra.mxu0 %v710
        %745 = vmatprep.subr.mxu0 0.0
        %746 = vmatpush1.msra.mxu0 %v711
        %747 = vmatprep.subr.mxu0 0.0
        %748 = vmatpush1.msra.mxu0 0.0
        %749 = vmatprep.subr.mxu0 0.0
        %750 = vmatpush1.msra.mxu0 0.0
        %751 = vmatprep.subr.mxu0 0.0
        %752 = vmatpush1.msra.mxu0 0.0
        %753 = vmatprep.subr.mxu0 0.0
        %754 = vmatpush1.msra.mxu0 0.0
        %755 = vmatprep.subr.mxu0 0.0
        %756 = vmatpush1.msra.mxu0 0.0
        %757 = vmatprep.subr.mxu0 0.0
        %758 = vmatpush1.msra.mxu0 0.0
        %759 = vmatprep.subr.mxu0 0.0
        %760 = vmatpush1.msra.mxu0 0.0
        %761 = vmatprep.subr.mxu0 0.0
        %762 = vmatpush1.msra.mxu0 0.0
        %763 = vmatprep.subr.mxu0 0.0
        %764 = vmatpush1.msra.mxu0 0.0
        %765 = vmatprep.subr.mxu0 0.0
        %766 = vmatpush1.msra.mxu0 0.0
        %767 = vmatprep.subr.mxu0 0.0
        %768 = vmatpush1.msra.mxu0 0.0
        %769 = vmatprep.subr.mxu0 0.0
        %770 = vmatpush1.msra.mxu0 0.0
        %771 = vmatprep.subr.mxu0 0.0
        %772 = vmatpush1.msra.mxu0 0.0
        %773 = vmatprep.subr.mxu0 0.0
        %774 = vmatpush1.msra.mxu0 0.0
        %775 = vmatprep.subr.mxu0 0.0
        %776 = vmatpush1.msra.mxu0 0.0
        %777 = vmatprep.subr.mxu0 0.0
        %778 = vmatpush1.msra.mxu0 0.0
        %779 = vmatprep.subr.mxu0 0.0
        %780 = vmatpush1.msra.mxu0 0.0
        %781 = vmatprep.subr.mxu0 0.0
        %782 = vmatpush1.msra.mxu0 0.0
        %783 = vmatprep.subr.mxu0 0.0
        %784 = vmatpush1.msra.mxu0 0.0
        %785 = vmatprep.subr.mxu0 0.0
        %786 = vmatpush1.msra.mxu0 0.0
        %787 = vmatprep.subr.mxu0 0.0
        %788 = vmatpush1.msra.mxu0 0.0
        %789 = vmatprep.subr.mxu0 0.0
        %790 = vmatpush1.msra.mxu0 0.0
        %791 = vmatprep.subr.mxu0 0.0
        %792 = vmatpush1.msra.mxu0 0.0
        %793 = vmatprep.subr.mxu0 0.0
        %794 = vmatpush1.msra.mxu0 0.0
        %795 = vmatprep.mubr.f32.mxu0 0.0
        %796 = vmatmul.mubr.f32.gmra.mrb[0].mxu0 %v729
        %v797 = vpop.f32.mrb[0].mxu0
        %v798 = vadd.f32 %v726, %v797
        %v799 = vpop.f32.mrb[0].mxu0
        %800 = vdwg.mxu0
        %s801 = sadd.s32 %s274, 0
        %s802 = ssub.s32 %s275, %s801
        %p803 = scmp.gt.s32.totalorder %s802, 0
        %s804 = scalar_select %p803, %s802, 0
        %p805 = scmp.lt.s32.totalorder %s804, 8
        %s806 = scalar_select %p805, %s804, 8
        %p807 = scmp.gt.s32.totalorder %s806, 0
        // Predicated region
        $region317: #{tpu_custom_call.1} parent=43 // pred_check
          %p808 = pneg %p807
        $region318: #{tpu_custom_call.1} parent=43 // pred_check_branch
          %810 = sbr.rel (%p808) target = $region320
        $region319: #{tpu_custom_call.1} parent=43 // pred_region
          %s811 = smul.u32 1, 1
          %s812 = sshll.u32 %s811, 4
          %813 = dma.done [#allocation3], %s812
        $region320: #{tpu_custom_call.1} parent=43 // pred_fallthru
          _
        %p814 = scmp.gt.s32.totalorder %s806, 1
        // Predicated region
        $region321: #{tpu_custom_call.1} parent=43 // pred_check
          %p815 = pneg %p814
        $region322: #{tpu_custom_call.1} parent=43 // pred_check_branch
          %817 = sbr.rel (%p815) target = $region324
        $region323: #{tpu_custom_call.1} parent=43 // pred_region
          %s818 = smul.u32 1, 1
          %s819 = sshll.u32 %s818, 4
          %820 = dma.done [#allocation3], %s819
        $region324: #{tpu_custom_call.1} parent=43 // pred_fallthru
          _
        %p821 = scmp.gt.s32.totalorder %s806, 2
        // Predicated region
        $region325: #{tpu_custom_call.1} parent=43 // pred_check
          %p822 = pneg %p821
        $region326: #{tpu_custom_call.1} parent=43 // pred_check_branch
          %824 = sbr.rel (%p822) target = $region328
        $region327: #{tpu_custom_call.1} parent=43 // pred_region
          %s825 = smul.u32 1, 1
          %s826 = sshll.u32 %s825, 4
          %827 = dma.done [#allocation3], %s826
        $region328: #{tpu_custom_call.1} parent=43 // pred_fallthru
          _
        %p828 = scmp.gt.s32.totalorder %s806, 3
        // Predicated region
        $region329: #{tpu_custom_call.1} parent=43 // pred_check
          %p829 = pneg %p828
        $region330: #{tpu_custom_call.1} parent=43 // pred_check_branch
          %831 = sbr.rel (%p829) target = $region332
        $region331: #{tpu_custom_call.1} parent=43 // pred_region
          %s832 = smul.u32 1, 1
          %s833 = sshll.u32 %s832, 4
          %834 = dma.done [#allocation3], %s833
        $region332: #{tpu_custom_call.1} parent=43 // pred_fallthru
          _
        %p835 = scmp.gt.s32.totalorder %s806, 4
        // Predicated region
        $region333: #{tpu_custom_call.1} parent=43 // pred_check
          %p836 = pneg %p835
        $region334: #{tpu_custom_call.1} parent=43 // pred_check_branch
          %838 = sbr.rel (%p836) target = $region336
        $region335: #{tpu_custom_call.1} parent=43 // pred_region
          %s839 = smul.u32 1, 1
          %s840 = sshll.u32 %s839, 4
          %841 = dma.done [#allocation3], %s840
        $region336: #{tpu_custom_call.1} parent=43 // pred_fallthru
          _
        %p842 = scmp.gt.s32.totalorder %s806, 5
        // Predicated region
        $region337: #{tpu_custom_call.1} parent=43 // pred_check
          %p843 = pneg %p842
        $region338: #{tpu_custom_call.1} parent=43 // pred_check_branch
          %845 = sbr.rel (%p843) target = $region340
        $region339: #{tpu_custom_call.1} parent=43 // pred_region
          %s846 = smul.u32 1, 1
          %s847 = sshll.u32 %s846, 4
          %848 = dma.done [#allocation3], %s847
        $region340: #{tpu_custom_call.1} parent=43 // pred_fallthru
          _
        %p849 = scmp.gt.s32.totalorder %s806, 6
        // Predicated region
        $region341: #{tpu_custom_call.1} parent=43 // pred_check
          %p850 = pneg %p849
        $region342: #{tpu_custom_call.1} parent=43 // pred_check_branch
          %852 = sbr.rel (%p850) target = $region344
        $region343: #{tpu_custom_call.1} parent=43 // pred_region
          %s853 = smul.u32 1, 1
          %s854 = sshll.u32 %s853, 4
          %855 = dma.done [#allocation3], %s854
        $region344: #{tpu_custom_call.1} parent=43 // pred_fallthru
          _
        %p856 = scmp.gt.s32.totalorder %s806, 7
        // Predicated region
        $region345: #{tpu_custom_call.1} parent=43 // pred_check
          %p857 = pneg %p856
        $region346: #{tpu_custom_call.1} parent=43 // pred_check_branch
          %859 = sbr.rel (%p857) target = $region348
        $region347: #{tpu_custom_call.1} parent=43 // pred_region
          %s860 = smul.u32 1, 1
          %s861 = sshll.u32 %s860, 4
          %862 = dma.done [#allocation3], %s861
        $region348: #{tpu_custom_call.1} parent=43 // pred_fallthru
          _
        %v863 = vld [vmem:[#allocation2] sm:$0xff]
        %v864 = vadd.f32 %v798, %v863
        %vm865 = vcmask 261120
        %v866 = vsel %vm865, %v864, 0.0
        %867 = vadd.xlane.f32.xlu0 %v866
        %v868 = vpop.xlane.xlu0 %867
        %v869 = vrcp.pop 32.0
        %v870 = vmul.f32 %v868, %v869
        %v871 = vmul.f32 %v864, %v864
        %v872 = vsel %vm865, %v871, 0.0
        %873 = vadd.xlane.f32.xlu0 %v872
        %v874 = vpop.xlane.xlu0 %873
        %v875 = vmul.f32 %v874, %v869
        %v876 = vmul.f32 %v870, %v870
        %v877 = vsub.f32 %v875, %v876
        %v878 = vmax.f32 %v877, 0.0
        %v879 = vsub.f32 %v864, %v870
        %v880 = vadd.f32 %v878, 1e-12
        %v881 = vrsqrt.pop %v880
        %v882 = vmul.f32 %v879, %v881
        %v884 = vlaneseq
        %v885 = vshrl.u32 %v884, 7
        %v886 = vsub.s32 0, %v885
        %v887 = vrot.slane %v690, %v886
        %v889 = vmul.f32 %v882, %v887
        %v891 = vlaneseq
        %v892 = vshrl.u32 %v891, 7
        %v893 = vsub.s32 0, %v892
        %v894 = vrot.slane %v691, %v893
        %v896 = vadd.f32 %v889, %v894
        %897 = vst.msk [vmem:[%s265] sm:$0xff] %vm865, %v896
        %s898 = sand.u32 %s174, 1
        %s899 = scalar_lea.sflag [#allocation8], %s898
        %s900 = sand.u32 %s174, 1
        %s901 = smul.addr %s900, 8
        %s902 = scalar_lea.vmem [#allocation7], %s901
        // Predicated region
        $region349: #{tpu_custom_call.1} parent=43 // pred_check
          %p903 = pneg %p184
        $region350: #{tpu_custom_call.1} parent=43 // pred_check_branch
          %905 = sbr.rel (%p903) target = $region352
        $region351: #{tpu_custom_call.1} parent=43 // pred_region
          %s907 = ssub.s32 128, 128
          %908 = vsyncadd %s899, %s907
          %s909 = smul.addr %s30, 128
          %s910 = scalar_lea.hbm %s9, %s909
          %s912 = sshll.u32 %s902, 4
          %s913 = int_to_ptr.vmem [resolvable:$true] %s912
          %915 = dma.vmem_to_hbm [thread:$0]  %s913, 128, %s910, %s899
        $region352: #{tpu_custom_call.1} parent=43 // pred_fallthru
          _
      $region44: #{tpu_custom_call.1} parent=5 // pred_fallthru
        _
      %p916 = scmp.le.s32.totalorder 2, %s25
      // Predicated region
      $region353: #{tpu_custom_call.1} parent=5 // pred_check
        %p917 = pneg %p916
      $region354: #{tpu_custom_call.1} parent=5 // pred_check_branch
        %919 = sbr.rel (%p917) target = $region356
      $region355: #{tpu_custom_call.1} parent=5 // pred_region
        %s920 = ssub.s32 %s25, 2
        // Predicated region
        $region357: #{tpu_custom_call.1} parent=355 // pred_check
          %p921 = pneg %p190
        $region358: #{tpu_custom_call.1} parent=355 // pred_check_branch
          %923 = sbr.rel (%p921) target = $region360
        $region359: #{tpu_custom_call.1} parent=355 // pred_region
          %s924 = sand.u32 %s175, 1
          %s925 = scalar_lea.sflag [#allocation8], %s924
          %s926 = sand.u32 %s175, 1
          %s927 = smul.addr %s926, 8
          %s928 = scalar_lea.vmem [#allocation7], %s927
          %929 = dma.done %s925, 128
        $region360: #{tpu_custom_call.1} parent=355 // pred_fallthru
          _
      $region356: #{tpu_custom_call.1} parent=5 // pred_fallthru
        _
    $region6: #{tpu_custom_call.1} parent=1 // loop_footer
      %s29 = sadd.s32 1, %s25
    $region7: #{tpu_custom_call.1} parent=1 // loop_footer_branch
      %24 = sbr.rel target = $region3
    $region8: #{tpu_custom_call.1} parent=1 // loop_exit
      _
    %930 = vsyncpa [#allocation8], 1
    %s931 = scalar_lea.sflag [#allocation8], 1
    %932 = vsyncpa %s931, 1
  %933 = vsyncmov [#allocation3]
  %s934 = vpop.sfrf %933
  %p935 = scmp.eq.s32.totalorder %s934, 0
  %p936 = pneg %p935
  %938 = shalt.err (%p936)

</llo_original>
